<compile_context>
chip_gen: v7x
topology: tpu7x:2x2x1
jax: 0.10.0
libtpu: 0.0.40
codegen_flags: <defaults>
</compile_context>

<pallas_src>
import jax
import jax.numpy as jnp
from jax import lax
from jax.experimental import pallas as pl
from jax.experimental.pallas import tpu as pltpu


# ----------------------------------------------------------------------------
# Pallas kernel: fused 2x bilinear upsample + 3x3 conv (BN folded) + PReLU
# ----------------------------------------------------------------------------
def _make_kernel(H, W, Cin, Cout, t_hi):
    """Kernel for one (batch, row-tile) grid point.

    t_hi : input rows per tile (original resolution), tile produces
           t_ho = 2*t_hi output rows at upsampled resolution.
    """
    t_ho = 2 * t_hi

    def kernel(x_ref, w_ref, b_ref, a_ref, o_ref, acc_e_ref, acc_o_ref):
        # x_ref : (1, t_hi+2, W+2, Cin)  original-res rows, 1-px replicate halo
        # w_ref : (3, 3*Cin, Cout)       BN-folded weight, K ordered dx-major
        # b_ref : (1, Cout)   a_ref : (1, 1)
        # o_ref : (1, t_ho, W, 2*Cout)   even cols -> [..., :Cout], odd -> rest
        x = x_ref[0]                                         # (t_hi+2, W+2, Cin)

        # ---- 2x bilinear upsample along H (align_corners=False) -------------
        # local up-row t corresponds to global up-row u = 2*i0 - 1 + t
        top = x[0:t_hi + 1]
        bot = x[1:t_hi + 2]
        h_even = 0.75 * top + 0.25 * bot                     # t even
        h_odd = 0.25 * top + 0.75 * bot                      # t odd
        # interleave rows: leading-dim stack+merge only (no lane/sublane moves)
        xh = jnp.stack([h_even, h_odd], axis=1).reshape(t_ho + 2, W + 2, Cin)

        # conv zero-padding of the *upsampled* image along H (rows -1 and 2H)
        i0 = pl.program_id(1) * t_hi
        u = 2 * i0 - 1 + lax.broadcasted_iota(jnp.int32, (t_ho + 2, 1, 1), 0)
        xh = jnp.where((u >= 0) & (u < 2 * H), xh, 0.0)

        # ---- 2x bilinear upsample along W, kept parity-split -----------------
        c0 = xh[:, 0:W, :]
        c1 = xh[:, 1:W + 1, :]
        c2 = xh[:, 2:W + 2, :]
        e_cols = 0.25 * c0 + 0.75 * c1                       # up cols 2j
        o_cols = 0.75 * c1 + 0.25 * c2                       # up cols 2j+1
        zcol = jnp.zeros((t_ho + 2, 1, Cin), jnp.float32)
        o_m1 = jnp.concatenate([zcol, o_cols[:, 0:W - 1, :]], axis=1)  # col 2j-1
        e_p1 = jnp.concatenate([e_cols[:, 1:W, :], zcol], axis=1)      # col 2j+2

        # dx taps concatenated on the channel (lane) axis -> K = 3*Cin,
        # hoisted out of the dy loop (3 W-shifts total instead of 9).
        p_even = jnp.concatenate([o_m1, e_cols, o_cols], axis=-1)  # (t_ho+2, W, 3Cin)
        p_odd = jnp.concatenate([e_cols, o_cols, e_p1], axis=-1)

        # ---- 3x3 conv: one K=3*Cin contraction per dy, f32 VMEM accumulator --
        for dy in range(3):
            w_dy = w_ref[dy]                                  # (3*Cin, Cout)
            pe = jnp.einsum("hwk,ko->hwo", p_even[dy:dy + t_ho], w_dy,
                            preferred_element_type=jnp.float32)
            po = jnp.einsum("hwk,ko->hwo", p_odd[dy:dy + t_ho], w_dy,
                            preferred_element_type=jnp.float32)
            if dy == 0:
                acc_e_ref[...] = pe
                acc_o_ref[...] = po
            else:
                acc_e_ref[...] += pe
                acc_o_ref[...] += po

        # ---- epilogue: folded (conv bias + BN) bias, then PReLU --------------
        bias = b_ref[0]                                       # (Cout,)
        alpha = a_ref[0, 0]
        ye = acc_e_ref[...] + bias
        yo = acc_o_ref[...] + bias
        ye = jnp.where(ye >= 0, ye, alpha * ye)
        yo = jnp.where(yo >= 0, yo, alpha * yo)
        o_ref[0, :, :, 0:Cout] = ye.astype(o_ref.dtype)
        o_ref[0, :, :, Cout:2 * Cout] = yo.astype(o_ref.dtype)

    return kernel


def _pick_tile_rows(H, W, Cin, Cout, budget_bytes=8 * 1024 * 1024):
    """Largest divisor of H whose per-tile working set fits a conservative
    VMEM budget (sized so double-buffering stays well inside v7x's 64 MiB)."""
    best = 1
    for t_hi in range(1, H + 1):
        if H % t_hi:
            continue
        t_ho = 2 * t_hi
        in_blk = (t_hi + 2) * (W + 2) * Cin * 4
        out_blk = t_ho * W * 2 * Cout * 4
        scratch = 2 * t_ho * W * Cout * 4
        interm = (t_ho + 2) * (W + 2) * Cin * 4 * 4          # xh, E, O, shifts
        interm += 2 * (t_ho + 2) * W * 3 * Cin * 4           # p_even, p_odd
        total = 2 * in_blk + 2 * out_blk + scratch + interm
        if total <= budget_bytes:
            best = t_hi
    return best


def conv_bn_prelu_up2x_pallas(x_nchw, wmat, bias, alpha, *, tile_rows=None,
                              vmem_limit_bytes=48 * 1024 * 1024):
    """x_nchw: (N, Cin, H, W);  wmat: (3, 3*Cin, Cout) BN-folded weight.
    Returns (N, Cout, 2H, 2W)."""
    N, Cin, H, W = x_nchw.shape
    Cout = wmat.shape[-1]
    if tile_rows is None:
        tile_rows = _pick_tile_rows(H, W, Cin, Cout)
    assert H % tile_rows == 0, (H, tile_rows)
    t_hi = tile_rows
    t_ho = 2 * t_hi
    n_t = H // t_hi

    # NHWC + 1-px replicate halo, then overlapping row windows (2-row halo),
    # all at ORIGINAL resolution (4x fewer bytes than the upsampled map that
    # the unfused version shuttled through HBM).
    x_nhwc = jnp.transpose(x_nchw, (0, 2, 3, 1))
    x_pad = jnp.pad(x_nhwc, ((0, 0), (1, 1), (1, 1), (0, 0)), mode="edge")
    row_idx = jnp.arange(n_t)[:, None] * t_hi + jnp.arange(t_hi + 2)[None, :]
    xg = x_pad[:, row_idx]                                   # (N, n_t, t_hi+2, W+2, Cin)
    xg = xg.reshape(N * n_t, t_hi + 2, W + 2, Cin).astype(jnp.float32)

    bias2 = bias.reshape(1, Cout).astype(jnp.float32)
    alpha2 = jnp.asarray(alpha, jnp.float32).reshape(1, 1)
    wmat = wmat.astype(jnp.float32)

    kernel = _make_kernel(H, W, Cin, Cout, t_hi)

    out = pl.pallas_call(
        kernel,
        out_shape=jax.ShapeDtypeStruct((N, 2 * H, W, 2 * Cout), jnp.float32),
        grid_spec=pltpu.PrefetchScalarGridSpec(
            num_scalar_prefetch=0,
            grid=(N, n_t),
            in_specs=[
                pl.BlockSpec((1, t_hi + 2, W + 2, Cin),
                             lambda n, t: (n * n_t + t, 0, 0, 0)),
                pl.BlockSpec((3, 3 * Cin, Cout), lambda n, t: (0, 0, 0)),
                pl.BlockSpec((1, Cout), lambda n, t: (0, 0)),
                pl.BlockSpec((1, 1), lambda n, t: (0, 0)),
            ],
            out_specs=pl.BlockSpec((1, t_ho, W, 2 * Cout),
                                   lambda n, t: (n, t, 0, 0)),
            scratch_shapes=[pltpu.VMEM((t_ho, W, Cout), jnp.float32),
                            pltpu.VMEM((t_ho, W, Cout), jnp.float32)],
        ),
        compiler_params=pltpu.CompilerParams(
            dimension_semantics=("parallel", "parallel"),
            vmem_limit_bytes=vmem_limit_bytes),
    )(xg, wmat, bias2, alpha2)

    # (N, 2H, W, 2*Cout) -> (N, 2H, 2W, Cout): even/odd column de-interleave is
    # a free row-major reshape in HBM; then back to NCHW.
    out_nhwc = out.reshape(N, 2 * H, 2 * W, Cout)
    return jnp.transpose(out_nhwc, (0, 3, 1, 2))


# ----------------------------------------------------------------------------
# Module wrapper (BN folding) + pure-JAX reference for correctness check
# ----------------------------------------------------------------------------
def psp_upsample_forward(x_nchw, params, *, tile_rows=None):
    w = params["conv_w"]                     # (3, 3, Cin, Cout), HWIO
    Cin, Cout = w.shape[2], w.shape[3]
    s = params["bn_gamma"] * lax.rsqrt(params["bn_var"] + params["bn_eps"])
    w_folded = w * s[None, None, None, :]
    wmat = w_folded.reshape(3, 3 * Cin, Cout)
    bias = (params["conv_b"] - params["bn_mean"]) * s + params["bn_beta"]
    return conv_bn_prelu_up2x_pallas(
        x_nchw, wmat, bias, params["prelu_alpha"], tile_rows=tile_rows)


def _bilinear_upsample_2x_nchw(x):
    """Reference: (N,C,H,W) -> (N,C,2H,2W), F.interpolate(bilinear, ac=False)."""
    def axis_weights(in_size):
        src = (jnp.arange(2 * in_size, dtype=jnp.float32) + 0.5) * 0.5 - 0.5
        src = jnp.clip(src, 0.0, in_size - 1.0)
        i0 = jnp.floor(src).astype(jnp.int32)
        i1 = jnp.minimum(i0 + 1, in_size - 1)
        return i0, i1, src - i0.astype(jnp.float32)

    N, C, H, W = x.shape
    h0, h1, hf = axis_weights(H)
    w0, w1, wf = axis_weights(W)
    xh = (x[:, :, h0, :] * (1.0 - hf)[None, None, :, None]
          + x[:, :, h1, :] * hf[None, None, :, None])
    return (xh[:, :, :, w0] * (1.0 - wf)[None, None, None, :]
            + xh[:, :, :, w1] * wf[None, None, None, :])


def psp_upsample_reference(x_nchw, params):
    xu = _bilinear_upsample_2x_nchw(x_nchw)
    x_nhwc = jnp.transpose(xu, (0, 2, 3, 1))
    y = lax.conv_general_dilated(
        x_nhwc, params["conv_w"], window_strides=(1, 1),
        padding=((1, 1), (1, 1)),
        dimension_numbers=("NHWC", "HWIO", "NHWC"))
    y = y + params["conv_b"]
    s = params["bn_gamma"] / jnp.sqrt(params["bn_var"] + params["bn_eps"])
    y = (y - params["bn_mean"]) * s + params["bn_beta"]
    y = jnp.where(y >= 0, y, params["prelu_alpha"] * y)
    return jnp.transpose(y, (0, 3, 1, 2))


def make_params(key, in_channels, out_channels):
    k_w, k_b, k_g, k_be, k_m, k_v = jax.random.split(key, 6)
    fan_in = in_channels * 3 * 3
    bound = 1.0 / jnp.sqrt(fan_in)
    return {
        "conv_w": jax.random.uniform(
            k_w, (3, 3, in_channels, out_channels), jnp.float32, -bound, bound),
        "conv_b": jax.random.uniform(
            k_b, (out_channels,), jnp.float32, -bound, bound),
        "bn_gamma": 1.0 + 0.1 * jax.random.normal(k_g, (out_channels,), jnp.float32),
        "bn_beta": 0.1 * jax.random.normal(k_be, (out_channels,), jnp.float32),
        "bn_mean": 0.1 * jax.random.normal(k_m, (out_channels,), jnp.float32),
        "bn_var": 1.0 + 0.1 * jax.random.uniform(k_v, (out_channels,), jnp.float32),
        "bn_eps": jnp.float32(1e-5),
        "prelu_alpha": jnp.float32(0.25),
    }


if __name__ == "__main__":
    key = jax.random.PRNGKey(0)
    k_x, k_p = jax.random.split(key)

    in_channels, out_channels = 4, 8
    x = jax.random.normal(k_x, (2, in_channels, 16, 16), jnp.float32)  # NCHW
    params = make_params(k_p, in_channels, out_channels)

    y_ref = psp_upsample_reference(x, params)

    # tile_rows=4 exercises the multi-tile halo/boundary-mask path;
    # tile_rows=None exercises the auto (VMEM-budget) tile choice.
    for tr in (4, None):
        y = jax.block_until_ready(psp_upsample_forward(x, params, tile_rows=tr))
        assert y.shape == (2, out_channels, 32, 32), y.shape
        assert jnp.all(jnp.isfinite(y))
        assert jnp.allclose(y, y_ref, rtol=1e-4, atol=1e-4), float(
            jnp.max(jnp.abs(y - y_ref)))

    print("KERNEL_OK")
</pallas_src>

<mosaic_0001>
module attributes {stable_mosaic.version = 11 : i64} {
  func.func @kernel(%arg0: i32, %arg1: i32, %arg2: memref<1x6x18x4xf32, #tpu.memory_space<vmem>>, %arg3: memref<3x12x8xf32, #tpu.memory_space<vmem>>, %arg4: memref<1x8xf32, #tpu.memory_space<vmem>>, %arg5: memref<1x1xf32, #tpu.memory_space<vmem>>, %arg6: memref<1x8x16x16xf32, #tpu.memory_space<vmem>>, %arg7: memref<8x16x8xf32, #tpu.memory_space<vmem>>, %arg8: memref<8x16x8xf32, #tpu.memory_space<vmem>>) attributes {dimension_semantics = [#tpu.dimension_semantics<parallel>, #tpu.dimension_semantics<parallel>], iteration_bounds = array<i64: 2, 4>, scalar_prefetch = 0 : i64, scratch_operands = 2 : i64, tpu.core_type = #tpu.core_type<tc>, window_params = [{transform_indices = @transform_0, window_bounds = array<i64: 1, 6, 18, 4>}, {pipeline_mode = #tpu.pipeline_mode<synchronous>, transform_indices = @transform_1, window_bounds = array<i64: 3, 12, 8>}, {pipeline_mode = #tpu.pipeline_mode<synchronous>, transform_indices = @transform_2, window_bounds = array<i64: 1, 8>}, {pipeline_mode = #tpu.pipeline_mode<synchronous>, transform_indices = @transform_3, window_bounds = array<i64: 1, 1>}, {transform_indices = @transform_4, window_bounds = array<i64: 1, 8, 16, 16>}]} {
    %c0 = arith.constant 0 : index
    %c0_0 = arith.constant 0 : index
    %c0_1 = arith.constant 0 : index
    %c0_2 = arith.constant 0 : index
    %0 = vector.load %arg2[%c0, %c0_0, %c0_1, %c0_2] : memref<1x6x18x4xf32, #tpu.memory_space<vmem>>, vector<1x6x18x4xf32>
    %1 = vector.shape_cast %0 : vector<1x6x18x4xf32> to vector<6x18x4xf32>
    %2 = vector.extract_strided_slice %1 {offsets = [0, 0, 0], sizes = [5, 18, 4], strides = [1, 1, 1]} : vector<6x18x4xf32> to vector<5x18x4xf32>
    %3 = vector.extract_strided_slice %1 {offsets = [1, 0, 0], sizes = [5, 18, 4], strides = [1, 1, 1]} : vector<6x18x4xf32> to vector<5x18x4xf32>
    %cst = arith.constant 7.500000e-01 : f32
    %4 = vector.broadcast %cst : f32 to vector<5x18x4xf32>
    %5 = arith.mulf %4, %2 : vector<5x18x4xf32>
    %cst_3 = arith.constant 2.500000e-01 : f32
    %6 = vector.broadcast %cst_3 : f32 to vector<5x18x4xf32>
    %7 = arith.mulf %6, %3 : vector<5x18x4xf32>
    %8 = arith.addf %5, %7 : vector<5x18x4xf32>
    %cst_4 = arith.constant 2.500000e-01 : f32
    %9 = vector.broadcast %cst_4 : f32 to vector<5x18x4xf32>
    %10 = arith.mulf %9, %2 : vector<5x18x4xf32>
    %cst_5 = arith.constant 7.500000e-01 : f32
    %11 = vector.broadcast %cst_5 : f32 to vector<5x18x4xf32>
    %12 = arith.mulf %11, %3 : vector<5x18x4xf32>
    %13 = arith.addf %10, %12 : vector<5x18x4xf32>
    %14 = vector.shape_cast %8 : vector<5x18x4xf32> to vector<5x1x18x4xf32>
    %15 = vector.shape_cast %13 : vector<5x18x4xf32> to vector<5x1x18x4xf32>
    %16 = tpu.concatenate %14, %15 in 1 : vector<5x1x18x4xf32>, vector<5x1x18x4xf32> -> vector<5x2x18x4xf32>
    %17 = vector.shape_cast %16 : vector<5x2x18x4xf32> to vector<10x18x4xf32>
    %c4_i32 = arith.constant 4 : i32
    %18 = arith.muli %arg1, %c4_i32 : i32
    %c2_i32 = arith.constant 2 : i32
    %19 = arith.muli %c2_i32, %18 : i32
    %c1_i32 = arith.constant 1 : i32
    %20 = arith.subi %19, %c1_i32 : i32
    %21 = tpu.iota {dimensions = array<i32: 0>} : vector<10x1x1xi32>
    %22 = vector.broadcast %20 : i32 to vector<10x1x1xi32>
    %23 = arith.addi %22, %21 : vector<10x1x1xi32>
    %c0_i32 = arith.constant 0 : i32
    %24 = vector.broadcast %c0_i32 : i32 to vector<10x1x1xi32>
    %25 = arith.cmpi sge, %23, %24 : vector<10x1x1xi32>
    %c32_i32 = arith.constant 32 : i32
    %26 = vector.broadcast %c32_i32 : i32 to vector<10x1x1xi32>
    %27 = arith.cmpi slt, %23, %26 : vector<10x1x1xi32>
    %28 = arith.andi %25, %27 : vector<10x1x1xi1>
    %cst_6 = arith.constant 0.000000e+00 : f32
    %29 = vector.shape_cast %28 : vector<10x1x1xi1> to vector<10x1x1xi1>
    %30 = vector.broadcast %29 : vector<10x1x1xi1> to vector<10x18x4xi1>
    %31 = vector.broadcast %cst_6 : f32 to vector<10x18x4xf32>
    %32 = arith.select %30, %17, %31 : vector<10x18x4xi1>, vector<10x18x4xf32>
    %33 = vector.extract_strided_slice %32 {offsets = [0, 0, 0], sizes = [10, 16, 4], strides = [1, 1, 1]} : vector<10x18x4xf32> to vector<10x16x4xf32>
    %34 = vector.extract_strided_slice %32 {offsets = [0, 1, 0], sizes = [10, 16, 4], strides = [1, 1, 1]} : vector<10x18x4xf32> to vector<10x16x4xf32>
    %35 = vector.extract_strided_slice %32 {offsets = [0, 2, 0], sizes = [10, 16, 4], strides = [1, 1, 1]} : vector<10x18x4xf32> to vector<10x16x4xf32>
    %cst_7 = arith.constant 2.500000e-01 : f32
    %36 = vector.broadcast %cst_7 : f32 to vector<10x16x4xf32>
    %37 = arith.mulf %36, %33 : vector<10x16x4xf32>
    %cst_8 = arith.constant 7.500000e-01 : f32
    %38 = vector.broadcast %cst_8 : f32 to vector<10x16x4xf32>
    %39 = arith.mulf %38, %34 : vector<10x16x4xf32>
    %40 = arith.addf %37, %39 : vector<10x16x4xf32>
    %cst_9 = arith.constant 7.500000e-01 : f32
    %41 = vector.broadcast %cst_9 : f32 to vector<10x16x4xf32>
    %42 = arith.mulf %41, %34 : vector<10x16x4xf32>
    %cst_10 = arith.constant 2.500000e-01 : f32
    %43 = vector.broadcast %cst_10 : f32 to vector<10x16x4xf32>
    %44 = arith.mulf %43, %35 : vector<10x16x4xf32>
    %45 = arith.addf %42, %44 : vector<10x16x4xf32>
    %cst_11 = arith.constant 0.000000e+00 : f32
    %46 = vector.broadcast %cst_11 : f32 to vector<10x1x4xf32>
    %47 = vector.extract_strided_slice %45 {offsets = [0, 0, 0], sizes = [10, 15, 4], strides = [1, 1, 1]} : vector<10x16x4xf32> to vector<10x15x4xf32>
    %48 = tpu.concatenate %46, %47 in 1 : vector<10x1x4xf32>, vector<10x15x4xf32> -> vector<10x16x4xf32>
    %49 = vector.extract_strided_slice %40 {offsets = [0, 1, 0], sizes = [10, 15, 4], strides = [1, 1, 1]} : vector<10x16x4xf32> to vector<10x15x4xf32>
    %50 = tpu.concatenate %49, %46 in 1 : vector<10x15x4xf32>, vector<10x1x4xf32> -> vector<10x16x4xf32>
    %51 = tpu.concatenate %48, %40, %45 in 2 : vector<10x16x4xf32>, vector<10x16x4xf32>, vector<10x16x4xf32> -> vector<10x16x12xf32>
    %52 = tpu.concatenate %40, %45, %50 in 2 : vector<10x16x4xf32>, vector<10x16x4xf32>, vector<10x16x4xf32> -> vector<10x16x12xf32>
    %c0_12 = arith.constant 0 : index
    %c0_13 = arith.constant 0 : index
    %c0_14 = arith.constant 0 : index
    %53 = vector.load %arg3[%c0_12, %c0_13, %c0_14] : memref<3x12x8xf32, #tpu.memory_space<vmem>>, vector<1x12x8xf32>
    %54 = vector.shape_cast %53 : vector<1x12x8xf32> to vector<12x8xf32>
    %55 = vector.extract_strided_slice %51 {offsets = [0, 0, 0], sizes = [8, 16, 12], strides = [1, 1, 1]} : vector<10x16x12xf32> to vector<8x16x12xf32>
    "tpu.trace_start"() <{level = 10 : i32, message = "hwk,ko->hwo"}> : () -> ()
    %cst_15 = arith.constant dense<0.000000e+00> : vector<8x16x8xf32>
    %56 = tpu.matmul %55, %54, %cst_15 {dimension_numbers = #tpu.dot_dimension_numbers<[2], [0], [0, 1], [1], [0, 0, 0, 1, 1, 1], [], []>} : vector<8x16x12xf32>, vector<12x8xf32>, vector<8x16x8xf32> -> vector<8x16x8xf32>
    "tpu.trace_stop"() : () -> ()
    %57 = vector.extract_strided_slice %52 {offsets = [0, 0, 0], sizes = [8, 16, 12], strides = [1, 1, 1]} : vector<10x16x12xf32> to vector<8x16x12xf32>
    "tpu.trace_start"() <{level = 10 : i32, message = "hwk,ko->hwo"}> : () -> ()
    %cst_16 = arith.constant dense<0.000000e+00> : vector<8x16x8xf32>
    %58 = tpu.matmul %57, %54, %cst_16 {dimension_numbers = #tpu.dot_dimension_numbers<[2], [0], [0, 1], [1], [0, 0, 0, 1, 1, 1], [], []>} : vector<8x16x12xf32>, vector<12x8xf32>, vector<8x16x8xf32> -> vector<8x16x8xf32>
    "tpu.trace_stop"() : () -> ()
    %c0_17 = arith.constant 0 : index
    %c0_18 = arith.constant 0 : index
    %c0_19 = arith.constant 0 : index
    %59 = vector.load %arg7[%c0_17, %c0_18, %c0_19] : memref<8x16x8xf32, #tpu.memory_space<vmem>>, vector<8x16x8xf32>
    tpu.vector_store %arg7[%c0_17, %c0_18, %c0_19], %56 {strides = array<i32>} : memref<8x16x8xf32, #tpu.memory_space<vmem>>, vector<8x16x8xf32>,
    %c0_20 = arith.constant 0 : index
    %c0_21 = arith.constant 0 : index
    %c0_22 = arith.constant 0 : index
    %60 = vector.load %arg8[%c0_20, %c0_21, %c0_22] : memref<8x16x8xf32, #tpu.memory_space<vmem>>, vector<8x16x8xf32>
    tpu.vector_store %arg8[%c0_20, %c0_21, %c0_22], %58 {strides = array<i32>} : memref<8x16x8xf32, #tpu.memory_space<vmem>>, vector<8x16x8xf32>,
    %c1 = arith.constant 1 : index
    %c0_23 = arith.constant 0 : index
    %c0_24 = arith.constant 0 : index
    %61 = vector.load %arg3[%c1, %c0_23, %c0_24] : memref<3x12x8xf32, #tpu.memory_space<vmem>>, vector<1x12x8xf32>
    %62 = vector.shape_cast %61 : vector<1x12x8xf32> to vector<12x8xf32>
    %63 = vector.extract_strided_slice %51 {offsets = [1, 0, 0], sizes = [8, 16, 12], strides = [1, 1, 1]} : vector<10x16x12xf32> to vector<8x16x12xf32>
    "tpu.trace_start"() <{level = 10 : i32, message = "hwk,ko->hwo"}> : () -> ()
    %cst_25 = arith.constant dense<0.000000e+00> : vector<8x16x8xf32>
    %64 = tpu.matmul %63, %62, %cst_25 {dimension_numbers = #tpu.dot_dimension_numbers<[2], [0], [0, 1], [1], [0, 0, 0, 1, 1, 1], [], []>} : vector<8x16x12xf32>, vector<12x8xf32>, vector<8x16x8xf32> -> vector<8x16x8xf32>
    "tpu.trace_stop"() : () -> ()
    %65 = vector.extract_strided_slice %52 {offsets = [1, 0, 0], sizes = [8, 16, 12], strides = [1, 1, 1]} : vector<10x16x12xf32> to vector<8x16x12xf32>
    "tpu.trace_start"() <{level = 10 : i32, message = "hwk,ko->hwo"}> : () -> ()
    %cst_26 = arith.constant dense<0.000000e+00> : vector<8x16x8xf32>
    %66 = tpu.matmul %65, %62, %cst_26 {dimension_numbers = #tpu.dot_dimension_numbers<[2], [0], [0, 1], [1], [0, 0, 0, 1, 1, 1], [], []>} : vector<8x16x12xf32>, vector<12x8xf32>, vector<8x16x8xf32> -> vector<8x16x8xf32>
    "tpu.trace_stop"() : () -> ()
    %c0_27 = arith.constant 0 : index
    %c0_28 = arith.constant 0 : index
    %c0_29 = arith.constant 0 : index
    %67 = vector.load %arg7[%c0_27, %c0_28, %c0_29] : memref<8x16x8xf32, #tpu.memory_space<vmem>>, vector<8x16x8xf32>
    %68 = arith.addf %67, %64 : vector<8x16x8xf32>
    %c0_30 = arith.constant 0 : index
    %c0_31 = arith.constant 0 : index
    %c0_32 = arith.constant 0 : index
    %69 = vector.load %arg7[%c0_30, %c0_31, %c0_32] : memref<8x16x8xf32, #tpu.memory_space<vmem>>, vector<8x16x8xf32>
    tpu.vector_store %arg7[%c0_30, %c0_31, %c0_32], %68 {strides = array<i32>} : memref<8x16x8xf32, #tpu.memory_space<vmem>>, vector<8x16x8xf32>,
    %c0_33 = arith.constant 0 : index
    %c0_34 = arith.constant 0 : index
    %c0_35 = arith.constant 0 : index
    %70 = vector.load %arg8[%c0_33, %c0_34, %c0_35] : memref<8x16x8xf32, #tpu.memory_space<vmem>>, vector<8x16x8xf32>
    %71 = arith.addf %70, %66 : vector<8x16x8xf32>
    %c0_36 = arith.constant 0 : index
    %c0_37 = arith.constant 0 : index
    %c0_38 = arith.constant 0 : index
    %72 = vector.load %arg8[%c0_36, %c0_37, %c0_38] : memref<8x16x8xf32, #tpu.memory_space<vmem>>, vector<8x16x8xf32>
    tpu.vector_store %arg8[%c0_36, %c0_37, %c0_38], %71 {strides = array<i32>} : memref<8x16x8xf32, #tpu.memory_space<vmem>>, vector<8x16x8xf32>,
    %c2 = arith.constant 2 : index
    %c0_39 = arith.constant 0 : index
    %c0_40 = arith.constant 0 : index
    %73 = vector.load %arg3[%c2, %c0_39, %c0_40] : memref<3x12x8xf32, #tpu.memory_space<vmem>>, vector<1x12x8xf32>
    %74 = vector.shape_cast %73 : vector<1x12x8xf32> to vector<12x8xf32>
    %75 = vector.extract_strided_slice %51 {offsets = [2, 0, 0], sizes = [8, 16, 12], strides = [1, 1, 1]} : vector<10x16x12xf32> to vector<8x16x12xf32>
    "tpu.trace_start"() <{level = 10 : i32, message = "hwk,ko->hwo"}> : () -> ()
    %cst_41 = arith.constant dense<0.000000e+00> : vector<8x16x8xf32>
    %76 = tpu.matmul %75, %74, %cst_41 {dimension_numbers = #tpu.dot_dimension_numbers<[2], [0], [0, 1], [1], [0, 0, 0, 1, 1, 1], [], []>} : vector<8x16x12xf32>, vector<12x8xf32>, vector<8x16x8xf32> -> vector<8x16x8xf32>
    "tpu.trace_stop"() : () -> ()
    %77 = vector.extract_strided_slice %52 {offsets = [2, 0, 0], sizes = [8, 16, 12], strides = [1, 1, 1]} : vector<10x16x12xf32> to vector<8x16x12xf32>
    "tpu.trace_start"() <{level = 10 : i32, message = "hwk,ko->hwo"}> : () -> ()
    %cst_42 = arith.constant dense<0.000000e+00> : vector<8x16x8xf32>
    %78 = tpu.matmul %77, %74, %cst_42 {dimension_numbers = #tpu.dot_dimension_numbers<[2], [0], [0, 1], [1], [0, 0, 0, 1, 1, 1], [], []>} : vector<8x16x12xf32>, vector<12x8xf32>, vector<8x16x8xf32> -> vector<8x16x8xf32>
    "tpu.trace_stop"() : () -> ()
    %c0_43 = arith.constant 0 : index
    %c0_44 = arith.constant 0 : index
    %c0_45 = arith.constant 0 : index
    %79 = vector.load %arg7[%c0_43, %c0_44, %c0_45] : memref<8x16x8xf32, #tpu.memory_space<vmem>>, vector<8x16x8xf32>
    %80 = arith.addf %79, %76 : vector<8x16x8xf32>
    %c0_46 = arith.constant 0 : index
    %c0_47 = arith.constant 0 : index
    %c0_48 = arith.constant 0 : index
    %81 = vector.load %arg7[%c0_46, %c0_47, %c0_48] : memref<8x16x8xf32, #tpu.memory_space<vmem>>, vector<8x16x8xf32>
    tpu.vector_store %arg7[%c0_46, %c0_47, %c0_48], %80 {strides = array<i32>} : memref<8x16x8xf32, #tpu.memory_space<vmem>>, vector<8x16x8xf32>,
    %c0_49 = arith.constant 0 : index
    %c0_50 = arith.constant 0 : index
    %c0_51 = arith.constant 0 : index
    %82 = vector.load %arg8[%c0_49, %c0_50, %c0_51] : memref<8x16x8xf32, #tpu.memory_space<vmem>>, vector<8x16x8xf32>
    %83 = arith.addf %82, %78 : vector<8x16x8xf32>
    %c0_52 = arith.constant 0 : index
    %c0_53 = arith.constant 0 : index
    %c0_54 = arith.constant 0 : index
    %84 = vector.load %arg8[%c0_52, %c0_53, %c0_54] : memref<8x16x8xf32, #tpu.memory_space<vmem>>, vector<8x16x8xf32>
    tpu.vector_store %arg8[%c0_52, %c0_53, %c0_54], %83 {strides = array<i32>} : memref<8x16x8xf32, #tpu.memory_space<vmem>>, vector<8x16x8xf32>,
    %c0_55 = arith.constant 0 : index
    %c0_56 = arith.constant 0 : index
    %85 = vector.load %arg4[%c0_55, %c0_56] : memref<1x8xf32, #tpu.memory_space<vmem>>, vector<1x8xf32>
    %86 = vector.shape_cast %85 : vector<1x8xf32> to vector<8xf32>
    %c0_57 = arith.constant 0 : index
    %c0_58 = arith.constant 0 : index
    %87 = vector.load %arg5[%c0_57, %c0_58] : memref<1x1xf32, #tpu.memory_space<vmem>>, vector<1x1xf32>
    %88 = vector.extract %87[0, 0] : f32 from vector<1x1xf32>
    %c0_59 = arith.constant 0 : index
    %c0_60 = arith.constant 0 : index
    %c0_61 = arith.constant 0 : index
    %89 = vector.load %arg7[%c0_59, %c0_60, %c0_61] : memref<8x16x8xf32, #tpu.memory_space<vmem>>, vector<8x16x8xf32>
    %90 = vector.shape_cast %86 : vector<8xf32> to vector<1x1x8xf32>
    %91 = vector.broadcast %90 : vector<1x1x8xf32> to vector<8x16x8xf32>
    %92 = arith.addf %89, %91 : vector<8x16x8xf32>
    %c0_62 = arith.constant 0 : index
    %c0_63 = arith.constant 0 : index
    %c0_64 = arith.constant 0 : index
    %93 = vector.load %arg8[%c0_62, %c0_63, %c0_64] : memref<8x16x8xf32, #tpu.memory_space<vmem>>, vector<8x16x8xf32>
    %94 = vector.shape_cast %86 : vector<8xf32> to vector<1x1x8xf32>
    %95 = vector.broadcast %94 : vector<1x1x8xf32> to vector<8x16x8xf32>
    %96 = arith.addf %93, %95 : vector<8x16x8xf32>
    %cst_65 = arith.constant 0.000000e+00 : f32
    %97 = vector.broadcast %cst_65 : f32 to vector<8x16x8xf32>
    %98 = arith.cmpf oge, %92, %97 : vector<8x16x8xf32>
    %99 = vector.broadcast %88 : f32 to vector<8x16x8xf32>
    %100 = arith.mulf %99, %92 : vector<8x16x8xf32>
    %101 = arith.select %98, %92, %100 : vector<8x16x8xi1>, vector<8x16x8xf32>
    %cst_66 = arith.constant 0.000000e+00 : f32
    %102 = vector.broadcast %cst_66 : f32 to vector<8x16x8xf32>
    %103 = arith.cmpf oge, %96, %102 : vector<8x16x8xf32>
    %104 = vector.broadcast %88 : f32 to vector<8x16x8xf32>
    %105 = arith.mulf %104, %96 : vector<8x16x8xf32>
    %106 = arith.select %103, %96, %105 : vector<8x16x8xi1>, vector<8x16x8xf32>
    %c0_67 = arith.constant 0 : index
    %c0_68 = arith.constant 0 : index
    %c0_69 = arith.constant 0 : index
    %c0_70 = arith.constant 0 : index
    %107 = vector.load %arg6[%c0_67, %c0_68, %c0_69, %c0_70] : memref<1x8x16x16xf32, #tpu.memory_space<vmem>>, vector<1x8x16x8xf32>
    %108 = vector.shape_cast %107 : vector<1x8x16x8xf32> to vector<8x16x8xf32>
    %109 = vector.shape_cast %101 : vector<8x16x8xf32> to vector<1x8x16x8xf32>
    tpu.vector_store %arg6[%c0_67, %c0_68, %c0_69, %c0_70], %109 {strides = array<i32>} : memref<1x8x16x16xf32, #tpu.memory_space<vmem>>, vector<1x8x16x8xf32>,
    %c0_71 = arith.constant 0 : index
    %c0_72 = arith.constant 0 : index
    %c0_73 = arith.constant 0 : index
    %c8 = arith.constant 8 : index
    %110 = vector.load %arg6[%c0_71, %c0_72, %c0_73, %c8] : memref<1x8x16x16xf32, #tpu.memory_space<vmem>>, vector<1x8x16x8xf32>
    %111 = vector.shape_cast %110 : vector<1x8x16x8xf32> to vector<8x16x8xf32>
    %112 = vector.shape_cast %106 : vector<8x16x8xf32> to vector<1x8x16x8xf32>
    tpu.vector_store %arg6[%c0_71, %c0_72, %c0_73, %c8], %112 {strides = array<i32>} : memref<1x8x16x16xf32, #tpu.memory_space<vmem>>, vector<1x8x16x8xf32>,
    return
  }
  func.func @transform_0(%arg0: i32, %arg1: i32) -> (i32, i32, i32, i32) {
    %c4_i32 = arith.constant 4 : i32
    %0 = arith.muli %arg0, %c4_i32 : i32
    %1 = arith.addi %0, %arg1 : i32
    %c0_i32 = arith.constant 0 : i32
    %c0_i32_0 = arith.constant 0 : i32
    %c0_i32_1 = arith.constant 0 : i32
    %c0_i32_2 = arith.constant 0 : i32
    return %1, %c0_i32, %c0_i32_0, %c0_i32_1 : i32, i32, i32, i32
  }
  func.func @transform_1(%arg0: i32, %arg1: i32) -> (i32, i32, i32) {
    %c0_i32 = arith.constant 0 : i32
    %c0_i32_0 = arith.constant 0 : i32
    %c0_i32_1 = arith.constant 0 : i32
    %c0_i32_2 = arith.constant 0 : i32
    return %c0_i32, %c0_i32_0, %c0_i32_1 : i32, i32, i32
  }
  func.func @transform_2(%arg0: i32, %arg1: i32) -> (i32, i32) {
    %c0_i32 = arith.constant 0 : i32
    %c0_i32_0 = arith.constant 0 : i32
    %c0_i32_1 = arith.constant 0 : i32
    return %c0_i32, %c0_i32_0 : i32, i32
  }
  func.func @transform_3(%arg0: i32, %arg1: i32) -> (i32, i32) {
    %c0_i32 = arith.constant 0 : i32
    %c0_i32_0 = arith.constant 0 : i32
    %c0_i32_1 = arith.constant 0 : i32
    return %c0_i32, %c0_i32_0 : i32, i32
  }
  func.func @transform_4(%arg0: i32, %arg1: i32) -> (i32, i32, i32, i32) {
    %c0_i32 = arith.constant 0 : i32
    %c0_i32_0 = arith.constant 0 : i32
    %c0_i32_1 = arith.constant 0 : i32
    return %arg0, %arg1, %c0_i32, %c0_i32_0 : i32, i32, i32, i32
  }
}

</mosaic_0001>

<llo_original>
// kernel: tpu_custom_call.1
$region0: #{tpu_custom_call.1}
  #allocation0 [shape = 'u32[]', space=smem, size = 0x4, offset = 0x4, fixed_abs, tag = 'smem constant byte address 0x4 - core index']
  #allocation1 [shape = 'u32[144,128]{1,0:T(1,128)}', space=vmem, size = 0x12000, scoped, tag = 'internal scratch']
  #allocation2 [shape = 'f32[8,16,8]{2,1,0:T(8,128)}', space=vmem, size = 0x10000, scoped, tag = 'scratch operand']
  #allocation3 [shape = 'f32[8,16,8]{2,1,0:T(8,128)}', space=vmem, size = 0x10000, scoped, tag = 'scratch operand']
  #allocation4 [shape = 'f32[1,1]{1,0:T(1,128)S(1)}', space=vmem, size = 0x200, scoped, tag = 'scoped memory for tpu_custom_call.1']
  %s0 = inlined_call_operand.vmem [shape: f32[8,6,18,4], index: 0, kind: input, shape index: {}]
  %s1 = inlined_call_operand.vmem [shape: f32[3,12,8], index: 1, kind: input, shape index: {}]
  %s2 = inlined_call_operand.vmem [shape: f32[1,8], index: 2, kind: input, shape index: {}]
  %s3 = inlined_call_operand.<no memory space> [shape: f32[1,1], index: 3, kind: input, shape index: {}]
  %s4 = inlined_call_operand.vmem [shape: f32[2,32,16,16], index: 4, kind: output, shape index: {}]
  %s5 = sld [smem:[#allocation0]]
  $region49: #{tpu_custom_call.1} parent=0
    _
  %s7 = ssub.s32 1, %s5
  %s8 = scalar_select 0, %s7, %s5
  %v9 = vstv %s3
  %10 = vst [vmem:[#allocation4] sm:$0x1] %v9
  loop: start=0, step=1, limit=10
  $region2: #{tpu_custom_call.1} parent=0 // loop_pre_header
    _
  $region3: #{tpu_custom_call.1} parent=0 // loop_header
    %s12 = sphi 0, %s16
    %p13 = scmp.ge.s32.totalorder %s12, 10
    %s19 = sphi 0, %s31
    %s20 = sphi 0, %s27
    %s21 = sphi 0, %s19
    %s22 = sphi 0, %s20
    %s23 = sphi 0, %s21
    %s24 = sphi 0, %s22
    %s38 = sphi 0, %s40
    %s41 = sphi 0, %s38
    %s42 = sphi 0, %s41
    %s58 = sphi 0, %s42
    %s62 = sphi 0, %s62
    %s64 = sphi 0, %s62
    %s65 = sphi 0, %s64
    %s79 = sphi 0, %s65
    %s83 = sphi 0, %s83
    %s85 = sphi 0, %s83
    %s86 = sphi 0, %s85
    %s100 = sphi 0, %s86
    %s104 = sphi 0, %s104
    %s106 = sphi 0, %s104
    %s107 = sphi 0, %s106
    %s121 = sphi 0, %s107
    %s129 = sphi 0, %s131
    %s132 = sphi 0, %s129
    %s133 = sphi 0, %s132
    %s149 = sphi 0, %s133
  $region4: #{tpu_custom_call.1} parent=0 // loop_header_branch
    %15 = sbr.rel (%p13) target = $region8
  $region5: #{tpu_custom_call.1} parent=0 // loop_body
    %s17 = ssub.s32 %s12, 1
    %s18 = ssub.s32 %s12, 2
    %s25 = sadd.s32 1, %s20
    %p26 = scmp.ge.s32.totalorder %s25, 4
    %s27 = scalar_select %p26, 0, %s25
    %s28 = sadd.s32 1, %s19
    %s29 = scalar_select %p26, %s28, %s19
    %p30 = scmp.ge.s32.totalorder %s29, 2
    %s31 = scalar_select %p30, 0, %s29
    %s32 = smul.u32 %s19, 4
    %s33 = sadd.s32 %s32, %s20
    %s34 = smul.u32 %s31, 4
    %s35 = sadd.s32 %s34, %s27
    %s36 = ssub.s32 %s33, %s35
    %p37 = scmp.eq.s32.totalorder %s36, 0
    %s39 = sadd.s32 %s38, 1
    %s40 = scalar_select %p37, %s38, %s39
    %p43 = pneg %p37
    %p44 = scmp.eq.s32.totalorder %s12, 7
    %p45 = por %p43, %p44
    %p46 = scmp.ne.s32.totalorder %s38, %s41
    %p47 = scmp.eq.s32.totalorder %s12, 0
    %p48 = por %p46, %p47
    %p49 = scmp.ne.s32.totalorder %s38, %s41
    %p50 = scmp.eq.s32.totalorder %s17, 7
    %p51 = por %p49, %p50
    %p52 = scmp.ne.s32.totalorder %s41, %s42
    %p53 = scmp.eq.s32.totalorder %s17, 0
    %p54 = por %p52, %p53
    %p55 = scmp.ne.s32.totalorder %s41, %s42
    %p56 = scmp.eq.s32.totalorder %s18, 7
    %p57 = por %p55, %p56
    %p59 = scmp.ne.s32.totalorder %s42, %s58
    %p60 = scmp.eq.s32.totalorder %s18, 0
    %p61 = por %p59, %p60
    %s63 = sadd.s32 %s62, 1
    %p66 = scmp.eq.s32.totalorder %s12, 7
    %p67 = scmp.ne.s32.totalorder %s62, %s64
    %p68 = scmp.eq.s32.totalorder %s12, 0
    %p69 = por %p67, %p68
    %p70 = scmp.ne.s32.totalorder %s62, %s64
    %p71 = scmp.eq.s32.totalorder %s17, 7
    %p72 = por %p70, %p71
    %p73 = scmp.ne.s32.totalorder %s64, %s65
    %p74 = scmp.eq.s32.totalorder %s17, 0
    %p75 = por %p73, %p74
    %p76 = scmp.ne.s32.totalorder %s64, %s65
    %p77 = scmp.eq.s32.totalorder %s18, 7
    %p78 = por %p76, %p77
    %p80 = scmp.ne.s32.totalorder %s65, %s79
    %p81 = scmp.eq.s32.totalorder %s18, 0
    %p82 = por %p80, %p81
    %s84 = sadd.s32 %s83, 1
    %p87 = scmp.eq.s32.totalorder %s12, 7
    %p88 = scmp.ne.s32.totalorder %s83, %s85
    %p89 = scmp.eq.s32.totalorder %s12, 0
    %p90 = por %p88, %p89
    %p91 = scmp.ne.s32.totalorder %s83, %s85
    %p92 = scmp.eq.s32.totalorder %s17, 7
    %p93 = por %p91, %p92
    %p94 = scmp.ne.s32.totalorder %s85, %s86
    %p95 = scmp.eq.s32.totalorder %s17, 0
    %p96 = por %p94, %p95
    %p97 = scmp.ne.s32.totalorder %s85, %s86
    %p98 = scmp.eq.s32.totalorder %s18, 7
    %p99 = por %p97, %p98
    %p101 = scmp.ne.s32.totalorder %s86, %s100
    %p102 = scmp.eq.s32.totalorder %s18, 0
    %p103 = por %p101, %p102
    %s105 = sadd.s32 %s104, 1
    %p108 = scmp.eq.s32.totalorder %s12, 7
    %p109 = scmp.ne.s32.totalorder %s104, %s106
    %p110 = scmp.eq.s32.totalorder %s12, 0
    %p111 = por %p109, %p110
    %p112 = scmp.ne.s32.totalorder %s104, %s106
    %p113 = scmp.eq.s32.totalorder %s17, 7
    %p114 = por %p112, %p113
    %p115 = scmp.ne.s32.totalorder %s106, %s107
    %p116 = scmp.eq.s32.totalorder %s17, 0
    %p117 = por %p115, %p116
    %p118 = scmp.ne.s32.totalorder %s106, %s107
    %p119 = scmp.eq.s32.totalorder %s18, 7
    %p120 = por %p118, %p119
    %p122 = scmp.ne.s32.totalorder %s107, %s121
    %p123 = scmp.eq.s32.totalorder %s18, 0
    %p124 = por %p122, %p123
    %s125 = ssub.s32 %s19, %s31
    %s126 = ssub.s32 %s20, %s27
    %s127 = sor.u32 %s125, %s126
    %p128 = scmp.eq.s32.totalorder %s127, 0
    %s130 = sadd.s32 %s129, 1
    %s131 = scalar_select %p128, %s129, %s130
    %p134 = pneg %p128
    %p135 = scmp.eq.s32.totalorder %s12, 7
    %p136 = por %p134, %p135
    %p137 = scmp.ne.s32.totalorder %s129, %s132
    %p138 = scmp.eq.s32.totalorder %s12, 0
    %p139 = por %p137, %p138
    %p140 = scmp.ne.s32.totalorder %s129, %s132
    %p141 = scmp.eq.s32.totalorder %s17, 7
    %p142 = por %p140, %p141
    %p143 = scmp.ne.s32.totalorder %s132, %s133
    %p144 = scmp.eq.s32.totalorder %s17, 0
    %p145 = por %p143, %p144
    %p146 = scmp.ne.s32.totalorder %s132, %s133
    %p147 = scmp.eq.s32.totalorder %s18, 7
    %p148 = por %p146, %p147
    %p150 = scmp.ne.s32.totalorder %s133, %s149
    %p151 = scmp.eq.s32.totalorder %s18, 0
    %p152 = por %p150, %p151
    %p153 = scmp.le.s32.totalorder 1, %s12
    %p154 = scmp.lt.s32.totalorder %s12, 9
    %p155 = pnand %p153, %p154
    %p156 = pneg %p155
    // Predicated region
    $region9: #{tpu_custom_call.1} parent=5 // pred_check
      _
    $region10: #{tpu_custom_call.1} parent=5 // pred_check_branch
      %158 = sbr.rel (%p155) target = $region12
    $region11: #{tpu_custom_call.1} parent=5 // pred_region
      %s159 = ssub.s32 %s12, 1
      // Predicated region
      $region13: #{tpu_custom_call.1} parent=11 // pred_check
        %p160 = pneg %p75
      $region14: #{tpu_custom_call.1} parent=11 // pred_check_branch
        %162 = sbr.rel (%p160) target = $region16
      $region15: #{tpu_custom_call.1} parent=11 // pred_region
        _
      $region16: #{tpu_custom_call.1} parent=11 // pred_fallthru
        _
      // Predicated region
      $region17: #{tpu_custom_call.1} parent=11 // pred_check
        %p163 = pneg %p96
      $region18: #{tpu_custom_call.1} parent=11 // pred_check_branch
        %165 = sbr.rel (%p163) target = $region20
      $region19: #{tpu_custom_call.1} parent=11 // pred_region
        _
      $region20: #{tpu_custom_call.1} parent=11 // pred_fallthru
        _
      // Predicated region
      $region21: #{tpu_custom_call.1} parent=11 // pred_check
        %p166 = pneg %p117
      $region22: #{tpu_custom_call.1} parent=11 // pred_check_branch
        %168 = sbr.rel (%p166) target = $region24
      $region23: #{tpu_custom_call.1} parent=11 // pred_region
        _
      $region24: #{tpu_custom_call.1} parent=11 // pred_fallthru
        _
    $region12: #{tpu_custom_call.1} parent=5 // pred_fallthru
      _
    %p169 = scmp.lt.s32.totalorder %s12, 8
    // Predicated region
    $region25: #{tpu_custom_call.1} parent=5 // pred_check
      %p170 = pneg %p169
    $region26: #{tpu_custom_call.1} parent=5 // pred_check_branch
      %172 = sbr.rel (%p170) target = $region28
    $region27: #{tpu_custom_call.1} parent=5 // pred_region
      // Predicated region
      $region29: #{tpu_custom_call.1} parent=27 // pred_check
        %p173 = pneg %p48
      $region30: #{tpu_custom_call.1} parent=27 // pred_check_branch
        %175 = sbr.rel (%p173) target = $region32
      $region31: #{tpu_custom_call.1} parent=27 // pred_region
        %s176 = smul.u32 %s19, 4
        %s177 = sadd.s32 %s176, %s20
        %p178 = scmp.lt.s32.totalorder %s177, 7
        %s179 = scalar_select %p178, %s177, 7
        %s180 = smul.addr %s179, 18
        %s181 = smul.addr %s180, 8
        %s182 = scalar_lea.vmem %s0, %s181
        %s183 = smul.u32 %s19, 4
        %s184 = sadd.s32 %s183, %s20
      $region32: #{tpu_custom_call.1} parent=27 // pred_fallthru
        _
    $region28: #{tpu_custom_call.1} parent=5 // pred_fallthru
      _
    %p185 = scmp.le.s32.totalorder 1, %s12
    %p186 = scmp.lt.s32.totalorder %s12, 9
    %p187 = pnand %p185, %p186
    %p188 = pneg %p187
    // Predicated region
    $region33: #{tpu_custom_call.1} parent=5 // pred_check
      _
    $region34: #{tpu_custom_call.1} parent=5 // pred_check_branch
      %190 = sbr.rel (%p187) target = $region36
    $region35: #{tpu_custom_call.1} parent=5 // pred_region
      %s191 = ssub.s32 %s12, 1
      %s192 = smul.u32 %s21, 4
      %s193 = sadd.s32 %s192, %s22
      %p194 = scmp.lt.s32.totalorder %s193, 7
      %s195 = scalar_select %p194, %s193, 7
      %s196 = smul.addr %s195, 18
      %s197 = smul.addr %s196, 8
      %s198 = scalar_lea.vmem %s0, %s197
      %p199 = pneg %p54
      %p200 = pneg %p51
      %p201 = pneg %p75
      %p202 = pneg %p72
      %p203 = pneg %p96
      %p204 = pneg %p93
      %p205 = pneg %p117
      %p206 = pneg %p114
      %p207 = pneg %p145
      %p208 = pneg %p142
      %s209 = smul.u32 8, %s22
      %p210 = scmp.lt.s32.totalorder %s21, 1
      %s211 = scalar_select %p210, %s21, 1
      %p212 = scmp.lt.s32.totalorder %s209, 31
      %s213 = scalar_select %p212, %s209, 31
      %s214 = smul.addr %s213, 2
      %s215 = smul.addr %s211, 64
      %s216 = sadd.s32 %s214, %s215
      %s217 = smul.addr %s216, 8
      %s218 = scalar_lea.vmem %s4, %s217
      %s219 = smul.u32 %s21, 4
      %s220 = sadd.s32 %s219, %s22
      %p221 = scmp.lt.s32.totalorder %s220, 7
      %s222 = scalar_select %p221, %s220, 7
      %s223 = smul.addr %s222, 18
      %s224 = smul.addr %s223, 8
      %s225 = scalar_lea.vmem %s0, %s224
      %s226 = smul.u32 %s21, 4
      %s227 = sadd.s32 %s226, %s22
      %s228 = smul.u32 8, %s22
      %p229 = scmp.lt.s32.totalorder %s21, 1
      %s230 = scalar_select %p229, %s21, 1
      %p231 = scmp.lt.s32.totalorder %s228, 31
      %s232 = scalar_select %p231, %s228, 31
      %s233 = smul.addr %s232, 2
      %s234 = smul.addr %s230, 64
      %s235 = sadd.s32 %s233, %s234
      %s236 = smul.addr %s235, 8
      %s237 = scalar_lea.vmem %s4, %s236
      %s238 = smul.u32 8, %s22
      %v239 = vld [vmem:[%s225] sm:$0xff]
      %v240 = vld [vmem:[%s225 + $0x8] sm:$0xff]
      %v241 = vld [vmem:[%s225 + $0x10] sm:$0x3]
      %v242 = vld [vmem:[%s225 + $0x18] sm:$0xff]
      %v243 = vld [vmem:[%s225 + $0x20] sm:$0xff]
      %v244 = vld [vmem:[%s225 + $0x28] sm:$0x3]
      %v245 = vld [vmem:[%s225 + $0x30] sm:$0xff]
      %v246 = vld [vmem:[%s225 + $0x38] sm:$0xff]
      %v247 = vld [vmem:[%s225 + $0x40] sm:$0x3]
      %v248 = vld [vmem:[%s225 + $0x48] sm:$0xff]
      %v249 = vld [vmem:[%s225 + $0x50] sm:$0xff]
      %v250 = vld [vmem:[%s225 + $0x58] sm:$0x3]
      %v251 = vld [vmem:[%s225 + $0x60] sm:$0xff]
      %v252 = vld [vmem:[%s225 + $0x68] sm:$0xff]
      %v253 = vld [vmem:[%s225 + $0x70] sm:$0x3]
      %v254 = vld [vmem:[%s225 + $0x78] sm:$0xff]
      %v255 = vld [vmem:[%s225 + $0x80] sm:$0xff]
      %v256 = vld [vmem:[%s225 + $0x88] sm:$0x3]
      %v257 = vmul.f32 %v239, 0.75
      %v258 = vmul.f32 %v240, 0.75
      %v259 = vmul.f32 %v241, 0.75
      %v260 = vmul.f32 %v242, 0.75
      %v261 = vmul.f32 %v243, 0.75
      %v262 = vmul.f32 %v244, 0.75
      %v263 = vmul.f32 %v245, 0.75
      %v264 = vmul.f32 %v246, 0.75
      %v265 = vmul.f32 %v247, 0.75
      %v266 = vmul.f32 %v248, 0.75
      %v267 = vmul.f32 %v249, 0.75
      %v268 = vmul.f32 %v250, 0.75
      %v269 = vmul.f32 %v251, 0.75
      %v270 = vmul.f32 %v252, 0.75
      %v271 = vmul.f32 %v253, 0.75
      %v272 = vmul.f32 %v242, 0.25
      %v273 = vmul.f32 %v243, 0.25
      %v274 = vmul.f32 %v244, 0.25
      %v275 = vmul.f32 %v245, 0.25
      %v276 = vmul.f32 %v246, 0.25
      %v277 = vmul.f32 %v247, 0.25
      %v278 = vmul.f32 %v248, 0.25
      %v279 = vmul.f32 %v249, 0.25
      %v280 = vmul.f32 %v250, 0.25
      %v281 = vmul.f32 %v251, 0.25
      %v282 = vmul.f32 %v252, 0.25
      %v283 = vmul.f32 %v253, 0.25
      %v284 = vmul.f32 %v254, 0.25
      %v285 = vmul.f32 %v255, 0.25
      %v286 = vmul.f32 %v256, 0.25
      %v287 = vadd.f32 %v257, %v272
      %v288 = vadd.f32 %v258, %v273
      %v289 = vadd.f32 %v259, %v274
      %v290 = vadd.f32 %v260, %v275
      %v291 = vadd.f32 %v261, %v276
      %v292 = vadd.f32 %v262, %v277
      %v293 = vadd.f32 %v263, %v278
      %v294 = vadd.f32 %v264, %v279
      %v295 = vadd.f32 %v265, %v280
      %v296 = vadd.f32 %v266, %v281
      %v297 = vadd.f32 %v267, %v282
      %v298 = vadd.f32 %v268, %v283
      %v299 = vadd.f32 %v269, %v284
      %v300 = vadd.f32 %v270, %v285
      %v301 = vadd.f32 %v271, %v286
      %v302 = vmul.f32 %v239, 0.25
      %v303 = vmul.f32 %v240, 0.25
      %v304 = vmul.f32 %v241, 0.25
      %v305 = vmul.f32 %v254, 0.75
      %v306 = vmul.f32 %v255, 0.75
      %v307 = vmul.f32 %v256, 0.75
      %v308 = vadd.f32 %v302, %v260
      %v309 = vadd.f32 %v303, %v261
      %v310 = vadd.f32 %v304, %v262
      %v311 = vadd.f32 %v272, %v263
      %v312 = vadd.f32 %v273, %v264
      %v313 = vadd.f32 %v274, %v265
      %v314 = vadd.f32 %v275, %v266
      %v315 = vadd.f32 %v276, %v267
      %v316 = vadd.f32 %v277, %v268
      %v317 = vadd.f32 %v278, %v269
      %v318 = vadd.f32 %v279, %v270
      %v319 = vadd.f32 %v280, %v271
      %v320 = vadd.f32 %v281, %v305
      %v321 = vadd.f32 %v282, %v306
      %v322 = vadd.f32 %v283, %v307
      %s323 = smul.u32 %s22, 8
      %s324 = ssub.s32 %s323, 1
      %v325 = vstv %s324
      %v326 = vadd.s32 %v325, 1
      %v327 = vadd.s32 %v325, 2
      %v328 = vadd.s32 %v325, 3
      %v329 = vadd.s32 %v325, 4
      %v330 = vadd.s32 %v325, 5
      %v331 = vadd.s32 %v325, 6
      %v332 = vadd.s32 %v325, 7
      %v333 = vadd.s32 %v325, 8
      %v334 = vadd.s32 %v325, 9
      %vm335 = vcmp.ge.s32.totalorder %v325, 0
      %vm336 = vcmp.ge.s32.totalorder %v326, 0
      %vm337 = vcmp.ge.s32.totalorder %v327, 0
      %vm338 = vcmp.ge.s32.totalorder %v328, 0
      %vm339 = vcmp.ge.s32.totalorder %v329, 0
      %vm340 = vcmp.ge.s32.totalorder %v330, 0
      %vm341 = vcmp.ge.s32.totalorder %v331, 0
      %vm342 = vcmp.ge.s32.totalorder %v332, 0
      %vm343 = vcmp.ge.s32.totalorder %v333, 0
      %vm344 = vcmp.ge.s32.totalorder %v334, 0
      %vm345 = vcmp.lt.s32.totalorder %v325, 32
      %vm346 = vcmp.lt.s32.totalorder %v326, 32
      %vm347 = vcmp.lt.s32.totalorder %v327, 32
      %vm348 = vcmp.lt.s32.totalorder %v328, 32
      %vm349 = vcmp.lt.s32.totalorder %v329, 32
      %vm350 = vcmp.lt.s32.totalorder %v330, 32
      %vm351 = vcmp.lt.s32.totalorder %v331, 32
      %vm352 = vcmp.lt.s32.totalorder %v332, 32
      %vm353 = vcmp.lt.s32.totalorder %v333, 32
      %vm354 = vcmp.lt.s32.totalorder %v334, 32
      %vm355 = vmand %vm335, %vm345
      %vm356 = vmand %vm336, %vm346
      %vm357 = vmand %vm337, %vm347
      %vm358 = vmand %vm338, %vm348
      %vm359 = vmand %vm339, %vm349
      %vm360 = vmand %vm340, %vm350
      %vm361 = vmand %vm341, %vm351
      %vm362 = vmand %vm342, %vm352
      %vm363 = vmand %vm343, %vm353
      %vm364 = vmand %vm344, %vm354
      %v365 = vsel %vm355, 1, 0
      %v366 = vsel %vm356, 1, 0
      %v367 = vsel %vm357, 1, 0
      %v368 = vsel %vm358, 1, 0
      %v369 = vsel %vm359, 1, 0
      %v370 = vsel %vm360, 1, 0
      %v371 = vsel %vm361, 1, 0
      %v372 = vsel %vm362, 1, 0
      %v373 = vsel %vm363, 1, 0
      %v374 = vsel %vm364, 1, 0
      %vm375 = vcmp.eq.s32.totalorder %v365, 1
      %vm376 = vcmp.eq.s32.totalorder %v366, 1
      %vm377 = vcmp.eq.s32.totalorder %v367, 1
      %vm378 = vcmp.eq.s32.totalorder %v368, 1
      %vm379 = vcmp.eq.s32.totalorder %v369, 1
      %vm380 = vcmp.eq.s32.totalorder %v370, 1
      %vm381 = vcmp.eq.s32.totalorder %v371, 1
      %vm382 = vcmp.eq.s32.totalorder %v372, 1
      %vm383 = vcmp.eq.s32.totalorder %v373, 1
      %vm384 = vcmp.eq.s32.totalorder %v374, 1
      %v385 = vsel %vm375, %v287, 0.0
      %v386 = vsel %vm375, %v288, 0.0
      %v387 = vsel %vm375, %v289, 0.0
      %v388 = vsel %vm376, %v308, 0.0
      %v389 = vsel %vm376, %v309, 0.0
      %v390 = vsel %vm376, %v310, 0.0
      %v391 = vsel %vm377, %v290, 0.0
      %v392 = vsel %vm377, %v291, 0.0
      %v393 = vsel %vm377, %v292, 0.0
      %v394 = vsel %vm378, %v311, 0.0
      %v395 = vsel %vm378, %v312, 0.0
      %v396 = vsel %vm378, %v313, 0.0
      %v397 = vsel %vm379, %v293, 0.0
      %v398 = vsel %vm379, %v294, 0.0
      %v399 = vsel %vm379, %v295, 0.0
      %v400 = vsel %vm380, %v314, 0.0
      %v401 = vsel %vm380, %v315, 0.0
      %v402 = vsel %vm380, %v316, 0.0
      %v403 = vsel %vm381, %v296, 0.0
      %v404 = vsel %vm381, %v297, 0.0
      %v405 = vsel %vm381, %v298, 0.0
      %v406 = vsel %vm382, %v317, 0.0
      %v407 = vsel %vm382, %v318, 0.0
      %v408 = vsel %vm382, %v319, 0.0
      %v409 = vsel %vm383, %v299, 0.0
      %v410 = vsel %vm383, %v300, 0.0
      %v411 = vsel %vm383, %v301, 0.0
      %v412 = vsel %vm384, %v320, 0.0
      %v413 = vsel %vm384, %v321, 0.0
      %v414 = vsel %vm384, %v322, 0.0
      %v415 = vmul.f32 %v385, 0.25
      %v416 = vmul.f32 %v386, 0.25
      %v417 = vmul.f32 %v388, 0.25
      %v418 = vmul.f32 %v389, 0.25
      %v419 = vmul.f32 %v391, 0.25
      %v420 = vmul.f32 %v392, 0.25
      %v421 = vmul.f32 %v394, 0.25
      %v422 = vmul.f32 %v395, 0.25
      %v423 = vmul.f32 %v397, 0.25
      %v424 = vmul.f32 %v398, 0.25
      %v425 = vmul.f32 %v400, 0.25
      %v426 = vmul.f32 %v401, 0.25
      %v427 = vmul.f32 %v403, 0.25
      %v428 = vmul.f32 %v404, 0.25
      %v429 = vmul.f32 %v406, 0.25
      %v430 = vmul.f32 %v407, 0.25
      %v431 = vmul.f32 %v409, 0.25
      %v432 = vmul.f32 %v410, 0.25
      %v433 = vmul.f32 %v412, 0.25
      %v434 = vmul.f32 %v413, 0.25
      %v435 = vmul.f32 %v385, 0.75
      %v436 = vmul.f32 %v386, 0.75
      %v437 = vmul.f32 %v387, 0.75
      %v438 = vmul.f32 %v388, 0.75
      %v439 = vmul.f32 %v389, 0.75
      %v440 = vmul.f32 %v390, 0.75
      %v441 = vmul.f32 %v391, 0.75
      %v442 = vmul.f32 %v392, 0.75
      %v443 = vmul.f32 %v393, 0.75
      %v444 = vmul.f32 %v394, 0.75
      %v445 = vmul.f32 %v395, 0.75
      %v446 = vmul.f32 %v396, 0.75
      %v447 = vmul.f32 %v397, 0.75
      %v448 = vmul.f32 %v398, 0.75
      %v449 = vmul.f32 %v399, 0.75
      %v450 = vmul.f32 %v400, 0.75
      %v451 = vmul.f32 %v401, 0.75
      %v452 = vmul.f32 %v402, 0.75
      %v453 = vmul.f32 %v403, 0.75
      %v454 = vmul.f32 %v404, 0.75
      %v455 = vmul.f32 %v405, 0.75
      %v456 = vmul.f32 %v406, 0.75
      %v457 = vmul.f32 %v407, 0.75
      %v458 = vmul.f32 %v408, 0.75
      %v459 = vmul.f32 %v409, 0.75
      %v460 = vmul.f32 %v410, 0.75
      %v461 = vmul.f32 %v411, 0.75
      %v462 = vmul.f32 %v412, 0.75
      %v463 = vmul.f32 %v413, 0.75
      %v464 = vmul.f32 %v414, 0.75
      %vm495 = vcmask 1046528
      %v496 = vrot.slane %v435, 1
      %v497 = vrot.slane %v436, 1
      %v498 = vsel %vm495, %v496, %v497
      %v499 = vrot.slane %v437, 1
      %v500 = vsel %vm495, %v497, %v499
      %v501 = vrot.slane %v438, 1
      %v502 = vrot.slane %v439, 1
      %v503 = vsel %vm495, %v501, %v502
      %v504 = vrot.slane %v440, 1
      %v505 = vsel %vm495, %v502, %v504
      %v506 = vrot.slane %v441, 1
      %v507 = vrot.slane %v442, 1
      %v508 = vsel %vm495, %v506, %v507
      %v509 = vrot.slane %v443, 1
      %v510 = vsel %vm495, %v507, %v509
      %v511 = vrot.slane %v444, 1
      %v512 = vrot.slane %v445, 1
      %v513 = vsel %vm495, %v511, %v512
      %v514 = vrot.slane %v446, 1
      %v515 = vsel %vm495, %v512, %v514
      %v516 = vrot.slane %v447, 1
      %v517 = vrot.slane %v448, 1
      %v518 = vsel %vm495, %v516, %v517
      %v519 = vrot.slane %v449, 1
      %v520 = vsel %vm495, %v517, %v519
      %v521 = vrot.slane %v450, 1
      %v522 = vrot.slane %v451, 1
      %v523 = vsel %vm495, %v521, %v522
      %v524 = vrot.slane %v452, 1
      %v525 = vsel %vm495, %v522, %v524
      %v526 = vrot.slane %v453, 1
      %v527 = vrot.slane %v454, 1
      %v528 = vsel %vm495, %v526, %v527
      %v529 = vrot.slane %v455, 1
      %v530 = vsel %vm495, %v527, %v529
      %v531 = vrot.slane %v456, 1
      %v532 = vrot.slane %v457, 1
      %v533 = vsel %vm495, %v531, %v532
      %v534 = vrot.slane %v458, 1
      %v535 = vsel %vm495, %v532, %v534
      %v536 = vrot.slane %v459, 1
      %v537 = vrot.slane %v460, 1
      %v538 = vsel %vm495, %v536, %v537
      %v539 = vrot.slane %v461, 1
      %v540 = vsel %vm495, %v537, %v539
      %v541 = vrot.slane %v462, 1
      %v542 = vrot.slane %v463, 1
      %v543 = vsel %vm495, %v541, %v542
      %v544 = vrot.slane %v464, 1
      %v545 = vsel %vm495, %v542, %v544
      %v566 = vadd.f32 %v415, %v498
      %v567 = vadd.f32 %v416, %v500
      %v568 = vadd.f32 %v417, %v503
      %v569 = vadd.f32 %v418, %v505
      %v570 = vadd.f32 %v419, %v508
      %v571 = vadd.f32 %v420, %v510
      %v572 = vadd.f32 %v421, %v513
      %v573 = vadd.f32 %v422, %v515
      %v574 = vadd.f32 %v423, %v518
      %v575 = vadd.f32 %v424, %v520
      %v576 = vadd.f32 %v425, %v523
      %v577 = vadd.f32 %v426, %v525
      %v578 = vadd.f32 %v427, %v528
      %v579 = vadd.f32 %v428, %v530
      %v580 = vadd.f32 %v429, %v533
      %v581 = vadd.f32 %v430, %v535
      %v582 = vadd.f32 %v431, %v538
      %v583 = vadd.f32 %v432, %v540
      %v584 = vadd.f32 %v433, %v543
      %v585 = vadd.f32 %v434, %v545
      %v586 = vmul.f32 %v387, 0.25
      %v587 = vmul.f32 %v390, 0.25
      %v588 = vmul.f32 %v393, 0.25
      %v589 = vmul.f32 %v396, 0.25
      %v590 = vmul.f32 %v399, 0.25
      %v591 = vmul.f32 %v402, 0.25
      %v592 = vmul.f32 %v405, 0.25
      %v593 = vmul.f32 %v408, 0.25
      %v594 = vmul.f32 %v411, 0.25
      %v595 = vmul.f32 %v414, 0.25
      %v626 = vrot.slane %v415, 1
      %v627 = vrot.slane %v416, 1
      %v628 = vsel %vm495, %v626, %v627
      %v629 = vrot.slane %v586, 1
      %v630 = vsel %vm495, %v627, %v629
      %v631 = vrot.slane %v417, 1
      %v632 = vrot.slane %v418, 1
      %v633 = vsel %vm495, %v631, %v632
      %v634 = vrot.slane %v587, 1
      %v635 = vsel %vm495, %v632, %v634
      %v636 = vrot.slane %v419, 1
      %v637 = vrot.slane %v420, 1
      %v638 = vsel %vm495, %v636, %v637
      %v639 = vrot.slane %v588, 1
      %v640 = vsel %vm495, %v637, %v639
      %v641 = vrot.slane %v421, 1
      %v642 = vrot.slane %v422, 1
      %v643 = vsel %vm495, %v641, %v642
      %v644 = vrot.slane %v589, 1
      %v645 = vsel %vm495, %v642, %v644
      %v646 = vrot.slane %v423, 1
      %v647 = vrot.slane %v424, 1
      %v648 = vsel %vm495, %v646, %v647
      %v649 = vrot.slane %v590, 1
      %v650 = vsel %vm495, %v647, %v649
      %v651 = vrot.slane %v425, 1
      %v652 = vrot.slane %v426, 1
      %v653 = vsel %vm495, %v651, %v652
      %v654 = vrot.slane %v591, 1
      %v655 = vsel %vm495, %v652, %v654
      %v656 = vrot.slane %v427, 1
      %v657 = vrot.slane %v428, 1
      %v658 = vsel %vm495, %v656, %v657
      %v659 = vrot.slane %v592, 1
      %v660 = vsel %vm495, %v657, %v659
      %v661 = vrot.slane %v429, 1
      %v662 = vrot.slane %v430, 1
      %v663 = vsel %vm495, %v661, %v662
      %v664 = vrot.slane %v593, 1
      %v665 = vsel %vm495, %v662, %v664
      %v666 = vrot.slane %v431, 1
      %v667 = vrot.slane %v432, 1
      %v668 = vsel %vm495, %v666, %v667
      %v669 = vrot.slane %v594, 1
      %v670 = vsel %vm495, %v667, %v669
      %v671 = vrot.slane %v433, 1
      %v672 = vrot.slane %v434, 1
      %v673 = vsel %vm495, %v671, %v672
      %v674 = vrot.slane %v595, 1
      %v675 = vsel %vm495, %v672, %v674
      %v706 = vadd.f32 %v435, %v628
      %v707 = vadd.f32 %v436, %v630
      %v708 = vadd.f32 %v437, %v629
      %v709 = vadd.f32 %v438, %v633
      %v710 = vadd.f32 %v439, %v635
      %v711 = vadd.f32 %v440, %v634
      %v712 = vadd.f32 %v441, %v638
      %v713 = vadd.f32 %v442, %v640
      %v714 = vadd.f32 %v443, %v639
      %v715 = vadd.f32 %v444, %v643
      %v716 = vadd.f32 %v445, %v645
      %v717 = vadd.f32 %v446, %v644
      %v718 = vadd.f32 %v447, %v648
      %v719 = vadd.f32 %v448, %v650
      %v720 = vadd.f32 %v449, %v649
      %v721 = vadd.f32 %v450, %v653
      %v722 = vadd.f32 %v451, %v655
      %v723 = vadd.f32 %v452, %v654
      %v724 = vadd.f32 %v453, %v658
      %v725 = vadd.f32 %v454, %v660
      %v726 = vadd.f32 %v455, %v659
      %v727 = vadd.f32 %v456, %v663
      %v728 = vadd.f32 %v457, %v665
      %v729 = vadd.f32 %v458, %v664
      %v730 = vadd.f32 %v459, %v668
      %v731 = vadd.f32 %v460, %v670
      %v732 = vadd.f32 %v461, %v669
      %v733 = vadd.f32 %v462, %v673
      %v734 = vadd.f32 %v463, %v675
      %v735 = vadd.f32 %v464, %v674
      %vm736 = vcmask 1040384
      %v737 = vsel %vm736, 0.0, %v706
      %v738 = vsel %vm736, 0.0, %v709
      %v739 = vsel %vm736, 0.0, %v712
      %v740 = vsel %vm736, 0.0, %v715
      %v741 = vsel %vm736, 0.0, %v718
      %v742 = vsel %vm736, 0.0, %v721
      %v743 = vsel %vm736, 0.0, %v724
      %v744 = vsel %vm736, 0.0, %v727
      %v745 = vsel %vm736, 0.0, %v730
      %v746 = vsel %vm736, 0.0, %v733
      %v767 = vrot.slane %v566, 1
      %v768 = vrot.slane %v567, 1
      %v769 = vsel %vm495, %v767, %v768
      %v770 = vrot.slane %v568, 1
      %v771 = vrot.slane %v569, 1
      %v772 = vsel %vm495, %v770, %v771
      %v773 = vrot.slane %v570, 1
      %v774 = vrot.slane %v571, 1
      %v775 = vsel %vm495, %v773, %v774
      %v776 = vrot.slane %v572, 1
      %v777 = vrot.slane %v573, 1
      %v778 = vsel %vm495, %v776, %v777
      %v779 = vrot.slane %v574, 1
      %v780 = vrot.slane %v575, 1
      %v781 = vsel %vm495, %v779, %v780
      %v782 = vrot.slane %v576, 1
      %v783 = vrot.slane %v577, 1
      %v784 = vsel %vm495, %v782, %v783
      %v785 = vrot.slane %v578, 1
      %v786 = vrot.slane %v579, 1
      %v787 = vsel %vm495, %v785, %v786
      %v788 = vrot.slane %v580, 1
      %v789 = vrot.slane %v581, 1
      %v790 = vsel %vm495, %v788, %v789
      %v791 = vrot.slane %v582, 1
      %v792 = vrot.slane %v583, 1
      %v793 = vsel %vm495, %v791, %v792
      %v794 = vrot.slane %v584, 1
      %v795 = vrot.slane %v585, 1
      %v796 = vsel %vm495, %v794, %v795
      %v807 = vsel %vm495, %v768, 0.0
      %v808 = vsel %vm495, %v771, 0.0
      %v809 = vsel %vm495, %v774, 0.0
      %v810 = vsel %vm495, %v777, 0.0
      %v811 = vsel %vm495, %v780, 0.0
      %v812 = vsel %vm495, %v783, 0.0
      %v813 = vsel %vm495, %v786, 0.0
      %v814 = vsel %vm495, %v789, 0.0
      %v815 = vsel %vm495, %v792, 0.0
      %v816 = vsel %vm495, %v795, 0.0
      %817 = vrot.lane.b32.xlu0 %v566, 4
      %v818 = vpop.permute.xlu0 %817
      %819 = vrot.lane.b32.xlu0 %v567, 4
      %v820 = vpop.permute.xlu0 %819
      %821 = vrot.lane.b32.xlu0 %v568, 4
      %v822 = vpop.permute.xlu0 %821
      %823 = vrot.lane.b32.xlu0 %v569, 4
      %v824 = vpop.permute.xlu0 %823
      %825 = vrot.lane.b32.xlu0 %v570, 4
      %v826 = vpop.permute.xlu0 %825
      %827 = vrot.lane.b32.xlu0 %v571, 4
      %v828 = vpop.permute.xlu0 %827
      %829 = vrot.lane.b32.xlu0 %v572, 4
      %v830 = vpop.permute.xlu0 %829
      %831 = vrot.lane.b32.xlu0 %v573, 4
      %v832 = vpop.permute.xlu0 %831
      %833 = vrot.lane.b32.xlu0 %v574, 4
      %v834 = vpop.permute.xlu0 %833
      %835 = vrot.lane.b32.xlu0 %v575, 4
      %v836 = vpop.permute.xlu0 %835
      %837 = vrot.lane.b32.xlu0 %v576, 4
      %v838 = vpop.permute.xlu0 %837
      %839 = vrot.lane.b32.xlu0 %v577, 4
      %v840 = vpop.permute.xlu0 %839
      %841 = vrot.lane.b32.xlu0 %v578, 4
      %v842 = vpop.permute.xlu0 %841
      %843 = vrot.lane.b32.xlu0 %v579, 4
      %v844 = vpop.permute.xlu0 %843
      %845 = vrot.lane.b32.xlu0 %v580, 4
      %v846 = vpop.permute.xlu0 %845
      %847 = vrot.lane.b32.xlu0 %v581, 4
      %v848 = vpop.permute.xlu0 %847
      %849 = vrot.lane.b32.xlu0 %v582, 4
      %v850 = vpop.permute.xlu0 %849
      %851 = vrot.lane.b32.xlu0 %v583, 4
      %v852 = vpop.permute.xlu0 %851
      %853 = vrot.lane.b32.xlu0 %v584, 4
      %v854 = vpop.permute.xlu0 %853
      %855 = vrot.lane.b32.xlu0 %v585, 4
      %v856 = vpop.permute.xlu0 %855
      %v907 = vrot.slane %v706, 1
      %v908 = vrot.slane %v707, 1
      %v909 = vsel %vm495, %v907, %v908
      %v910 = vrot.slane %v708, 1
      %v911 = vsel %vm495, %v908, %v910
      %v912 = vrot.slane %v709, 1
      %v913 = vrot.slane %v710, 1
      %v914 = vsel %vm495, %v912, %v913
      %v915 = vrot.slane %v711, 1
      %v916 = vsel %vm495, %v913, %v915
      %v917 = vrot.slane %v712, 1
      %v918 = vrot.slane %v713, 1
      %v919 = vsel %vm495, %v917, %v918
      %v920 = vrot.slane %v714, 1
      %v921 = vsel %vm495, %v918, %v920
      %v922 = vrot.slane %v715, 1
      %v923 = vrot.slane %v716, 1
      %v924 = vsel %vm495, %v922, %v923
      %v925 = vrot.slane %v717, 1
      %v926 = vsel %vm495, %v923, %v925
      %v927 = vrot.slane %v718, 1
      %v928 = vrot.slane %v719, 1
      %v929 = vsel %vm495, %v927, %v928
      %v930 = vrot.slane %v720, 1
      %v931 = vsel %vm495, %v928, %v930
      %v932 = vrot.slane %v721, 1
      %v933 = vrot.slane %v722, 1
      %v934 = vsel %vm495, %v932, %v933
      %v935 = vrot.slane %v723, 1
      %v936 = vsel %vm495, %v933, %v935
      %v937 = vrot.slane %v724, 1
      %v938 = vrot.slane %v725, 1
      %v939 = vsel %vm495, %v937, %v938
      %v940 = vrot.slane %v726, 1
      %v941 = vsel %vm495, %v938, %v940
      %v942 = vrot.slane %v727, 1
      %v943 = vrot.slane %v728, 1
      %v944 = vsel %vm495, %v942, %v943
      %v945 = vrot.slane %v729, 1
      %v946 = vsel %vm495, %v943, %v945
      %v947 = vrot.slane %v730, 1
      %v948 = vrot.slane %v731, 1
      %v949 = vsel %vm495, %v947, %v948
      %v950 = vrot.slane %v732, 1
      %v951 = vsel %vm495, %v948, %v950
      %v952 = vrot.slane %v733, 1
      %v953 = vrot.slane %v734, 1
      %v954 = vsel %vm495, %v952, %v953
      %v955 = vrot.slane %v735, 1
      %v956 = vsel %vm495, %v953, %v955
      %957 = vrot.lane.b32.xlu0 %v909, 8
      %v958 = vpop.permute.xlu0 %957
      %959 = vrot.lane.b32.xlu0 %v911, 8
      %v960 = vpop.permute.xlu0 %959
      %961 = vrot.lane.b32.xlu0 %v914, 8
      %v962 = vpop.permute.xlu0 %961
      %963 = vrot.lane.b32.xlu0 %v916, 8
      %v964 = vpop.permute.xlu0 %963
      %965 = vrot.lane.b32.xlu0 %v919, 8
      %v966 = vpop.permute.xlu0 %965
      %967 = vrot.lane.b32.xlu0 %v921, 8
      %v968 = vpop.permute.xlu0 %967
      %969 = vrot.lane.b32.xlu0 %v924, 8
      %v970 = vpop.permute.xlu0 %969
      %971 = vrot.lane.b32.xlu0 %v926, 8
      %v972 = vpop.permute.xlu0 %971
      %973 = vrot.lane.b32.xlu0 %v929, 8
      %v974 = vpop.permute.xlu0 %973
      %975 = vrot.lane.b32.xlu0 %v931, 8
      %v976 = vpop.permute.xlu0 %975
      %977 = vrot.lane.b32.xlu0 %v934, 8
      %v978 = vpop.permute.xlu0 %977
      %979 = vrot.lane.b32.xlu0 %v936, 8
      %v980 = vpop.permute.xlu0 %979
      %981 = vrot.lane.b32.xlu0 %v939, 8
      %v982 = vpop.permute.xlu0 %981
      %983 = vrot.lane.b32.xlu0 %v941, 8
      %v984 = vpop.permute.xlu0 %983
      %985 = vrot.lane.b32.xlu0 %v944, 8
      %v986 = vpop.permute.xlu0 %985
      %987 = vrot.lane.b32.xlu0 %v946, 8
      %v988 = vpop.permute.xlu0 %987
      %989 = vrot.lane.b32.xlu0 %v949, 8
      %v990 = vpop.permute.xlu0 %989
      %991 = vrot.lane.b32.xlu0 %v951, 8
      %v992 = vpop.permute.xlu0 %991
      %993 = vrot.lane.b32.xlu0 %v954, 8
      %v994 = vpop.permute.xlu0 %993
      %995 = vrot.lane.b32.xlu0 %v956, 8
      %v996 = vpop.permute.xlu0 %995
      %vm1017 = vcmask 31744
      %v1018 = vsel %vm1017, %v737, %v818
      %v1019 = vsel %vm1017, %v707, %v820
      %v1020 = vsel %vm1017, %v738, %v822
      %v1021 = vsel %vm1017, %v710, %v824
      %v1022 = vsel %vm1017, %v739, %v826
      %v1023 = vsel %vm1017, %v713, %v828
      %v1024 = vsel %vm1017, %v740, %v830
      %v1025 = vsel %vm1017, %v716, %v832
      %v1026 = vsel %vm1017, %v741, %v834
      %v1027 = vsel %vm1017, %v719, %v836
      %v1028 = vsel %vm1017, %v742, %v838
      %v1029 = vsel %vm1017, %v722, %v840
      %v1030 = vsel %vm1017, %v743, %v842
      %v1031 = vsel %vm1017, %v725, %v844
      %v1032 = vsel %vm1017, %v744, %v846
      %v1033 = vsel %vm1017, %v728, %v848
      %v1034 = vsel %vm1017, %v745, %v850
      %v1035 = vsel %vm1017, %v731, %v852
      %v1036 = vsel %vm1017, %v746, %v854
      %v1037 = vsel %vm1017, %v734, %v856
      %vm1038 = vcmask 64512
      %v1039 = vsel %vm1038, %v1018, %v958
      %v1040 = vsel %vm1038, %v1019, %v960
      %v1041 = vsel %vm1038, %v1020, %v962
      %v1042 = vsel %vm1038, %v1021, %v964
      %v1043 = vsel %vm1038, %v1022, %v966
      %v1044 = vsel %vm1038, %v1023, %v968
      %v1045 = vsel %vm1038, %v1024, %v970
      %v1046 = vsel %vm1038, %v1025, %v972
      %v1047 = vsel %vm1038, %v1026, %v974
      %v1048 = vsel %vm1038, %v1027, %v976
      %v1049 = vsel %vm1038, %v1028, %v978
      %v1050 = vsel %vm1038, %v1029, %v980
      %v1051 = vsel %vm1038, %v1030, %v982
      %v1052 = vsel %vm1038, %v1031, %v984
      %v1053 = vsel %vm1038, %v1032, %v986
      %v1054 = vsel %vm1038, %v1033, %v988
      %v1055 = vsel %vm1038, %v1034, %v990
      %v1056 = vsel %vm1038, %v1035, %v992
      %v1057 = vsel %vm1038, %v1036, %v994
      %v1058 = vsel %vm1038, %v1037, %v996
      %1059 = vrot.lane.b32.xlu0 %v909, 4
      %v1060 = vpop.permute.xlu0 %1059
      %1061 = vrot.lane.b32.xlu0 %v911, 4
      %v1062 = vpop.permute.xlu0 %1061
      %1063 = vrot.lane.b32.xlu0 %v914, 4
      %v1064 = vpop.permute.xlu0 %1063
      %1065 = vrot.lane.b32.xlu0 %v916, 4
      %v1066 = vpop.permute.xlu0 %1065
      %1067 = vrot.lane.b32.xlu0 %v919, 4
      %v1068 = vpop.permute.xlu0 %1067
      %1069 = vrot.lane.b32.xlu0 %v921, 4
      %v1070 = vpop.permute.xlu0 %1069
      %1071 = vrot.lane.b32.xlu0 %v924, 4
      %v1072 = vpop.permute.xlu0 %1071
      %1073 = vrot.lane.b32.xlu0 %v926, 4
      %v1074 = vpop.permute.xlu0 %1073
      %1075 = vrot.lane.b32.xlu0 %v929, 4
      %v1076 = vpop.permute.xlu0 %1075
      %1077 = vrot.lane.b32.xlu0 %v931, 4
      %v1078 = vpop.permute.xlu0 %1077
      %1079 = vrot.lane.b32.xlu0 %v934, 4
      %v1080 = vpop.permute.xlu0 %1079
      %1081 = vrot.lane.b32.xlu0 %v936, 4
      %v1082 = vpop.permute.xlu0 %1081
      %1083 = vrot.lane.b32.xlu0 %v939, 4
      %v1084 = vpop.permute.xlu0 %1083
      %1085 = vrot.lane.b32.xlu0 %v941, 4
      %v1086 = vpop.permute.xlu0 %1085
      %1087 = vrot.lane.b32.xlu0 %v944, 4
      %v1088 = vpop.permute.xlu0 %1087
      %1089 = vrot.lane.b32.xlu0 %v946, 4
      %v1090 = vpop.permute.xlu0 %1089
      %1091 = vrot.lane.b32.xlu0 %v949, 4
      %v1092 = vpop.permute.xlu0 %1091
      %1093 = vrot.lane.b32.xlu0 %v951, 4
      %v1094 = vpop.permute.xlu0 %1093
      %1095 = vrot.lane.b32.xlu0 %v954, 4
      %v1096 = vpop.permute.xlu0 %1095
      %1097 = vrot.lane.b32.xlu0 %v956, 4
      %v1098 = vpop.permute.xlu0 %1097
      %1129 = vrot.lane.b32.xlu0 %v769, 8
      %v1130 = vpop.permute.xlu0 %1129
      %1131 = vrot.lane.b32.xlu0 %v807, 8
      %v1132 = vpop.permute.xlu0 %1131
      %1133 = vrot.lane.b32.xlu0 %v772, 8
      %v1134 = vpop.permute.xlu0 %1133
      %1135 = vrot.lane.b32.xlu0 %v808, 8
      %v1136 = vpop.permute.xlu0 %1135
      %1137 = vrot.lane.b32.xlu0 %v775, 8
      %v1138 = vpop.permute.xlu0 %1137
      %1139 = vrot.lane.b32.xlu0 %v809, 8
      %v1140 = vpop.permute.xlu0 %1139
      %1141 = vrot.lane.b32.xlu0 %v778, 8
      %v1142 = vpop.permute.xlu0 %1141
      %1143 = vrot.lane.b32.xlu0 %v810, 8
      %v1144 = vpop.permute.xlu0 %1143
      %1145 = vrot.lane.b32.xlu0 %v781, 8
      %v1146 = vpop.permute.xlu0 %1145
      %1147 = vrot.lane.b32.xlu0 %v811, 8
      %v1148 = vpop.permute.xlu0 %1147
      %1149 = vrot.lane.b32.xlu0 %v784, 8
      %v1150 = vpop.permute.xlu0 %1149
      %1151 = vrot.lane.b32.xlu0 %v812, 8
      %v1152 = vpop.permute.xlu0 %1151
      %1153 = vrot.lane.b32.xlu0 %v787, 8
      %v1154 = vpop.permute.xlu0 %1153
      %1155 = vrot.lane.b32.xlu0 %v813, 8
      %v1156 = vpop.permute.xlu0 %1155
      %1157 = vrot.lane.b32.xlu0 %v790, 8
      %v1158 = vpop.permute.xlu0 %1157
      %1159 = vrot.lane.b32.xlu0 %v814, 8
      %v1160 = vpop.permute.xlu0 %1159
      %1161 = vrot.lane.b32.xlu0 %v793, 8
      %v1162 = vpop.permute.xlu0 %1161
      %1163 = vrot.lane.b32.xlu0 %v815, 8
      %v1164 = vpop.permute.xlu0 %1163
      %1165 = vrot.lane.b32.xlu0 %v796, 8
      %v1166 = vpop.permute.xlu0 %1165
      %1167 = vrot.lane.b32.xlu0 %v816, 8
      %v1168 = vpop.permute.xlu0 %1167
      %v1189 = vsel %vm1017, %v566, %v1060
      %v1190 = vsel %vm1017, %v567, %v1062
      %v1191 = vsel %vm1017, %v568, %v1064
      %v1192 = vsel %vm1017, %v569, %v1066
      %v1193 = vsel %vm1017, %v570, %v1068
      %v1194 = vsel %vm1017, %v571, %v1070
      %v1195 = vsel %vm1017, %v572, %v1072
      %v1196 = vsel %vm1017, %v573, %v1074
      %v1197 = vsel %vm1017, %v574, %v1076
      %v1198 = vsel %vm1017, %v575, %v1078
      %v1199 = vsel %vm1017, %v576, %v1080
      %v1200 = vsel %vm1017, %v577, %v1082
      %v1201 = vsel %vm1017, %v578, %v1084
      %v1202 = vsel %vm1017, %v579, %v1086
      %v1203 = vsel %vm1017, %v580, %v1088
      %v1204 = vsel %vm1017, %v581, %v1090
      %v1205 = vsel %vm1017, %v582, %v1092
      %v1206 = vsel %vm1017, %v583, %v1094
      %v1207 = vsel %vm1017, %v584, %v1096
      %v1208 = vsel %vm1017, %v585, %v1098
      %v1209 = vsel %vm1038, %v1189, %v1130
      %v1210 = vsel %vm1038, %v1190, %v1132
      %v1211 = vsel %vm1038, %v1191, %v1134
      %v1212 = vsel %vm1038, %v1192, %v1136
      %v1213 = vsel %vm1038, %v1193, %v1138
      %v1214 = vsel %vm1038, %v1194, %v1140
      %v1215 = vsel %vm1038, %v1195, %v1142
      %v1216 = vsel %vm1038, %v1196, %v1144
      %v1217 = vsel %vm1038, %v1197, %v1146
      %v1218 = vsel %vm1038, %v1198, %v1148
      %v1219 = vsel %vm1038, %v1199, %v1150
      %v1220 = vsel %vm1038, %v1200, %v1152
      %v1221 = vsel %vm1038, %v1201, %v1154
      %v1222 = vsel %vm1038, %v1202, %v1156
      %v1223 = vsel %vm1038, %v1203, %v1158
      %v1224 = vsel %vm1038, %v1204, %v1160
      %v1225 = vsel %vm1038, %v1205, %v1162
      %v1226 = vsel %vm1038, %v1206, %v1164
      %v1227 = vsel %vm1038, %v1207, %v1166
      %v1228 = vsel %vm1038, %v1208, %v1168
      %v1229 = vld [vmem:[%s1] sm:$0xff]
      %v1230 = vld [vmem:[%s1 + $0x8] sm:$0xf]
      %vm1231 = vcmask 97280
      %v1233 = vsel %vm1231, %v1039, 0
      %v1236 = vsel %vm1231, %v1040, 0
      %v1239 = vsel %vm1231, %v1041, 0
      %v1242 = vsel %vm1231, %v1042, 0
      %v1245 = vsel %vm1231, %v1043, 0
      %v1248 = vsel %vm1231, %v1044, 0
      %v1251 = vsel %vm1231, %v1045, 0
      %v1254 = vsel %vm1231, %v1046, 0
      %v1257 = vsel %vm1231, %v1047, 0
      %v1260 = vsel %vm1231, %v1048, 0
      %v1263 = vsel %vm1231, %v1049, 0
      %v1266 = vsel %vm1231, %v1050, 0
      %v1269 = vsel %vm1231, %v1051, 0
      %v1272 = vsel %vm1231, %v1052, 0
      %v1275 = vsel %vm1231, %v1053, 0
      %v1278 = vsel %vm1231, %v1054, 0
      %vm1280 = vcmask 1043456
      %v1282 = vsel %vm1280, %v1230, 0
      %1284 = vmatprep.subr.mxu0 0.0
      %1285 = vmatpush1.msra.mxu0 %v1229
      %1286 = vmatprep.subr.mxu0 0.0
      %1287 = vmatpush1.msra.mxu0 %v1282
      %1288 = vmatprep.subr.mxu0 0.0
      %1289 = vmatpush1.msra.mxu0 0.0
      %1290 = vmatprep.subr.mxu0 0.0
      %1291 = vmatpush1.msra.mxu0 0.0
      %1292 = vmatprep.subr.mxu0 0.0
      %1293 = vmatpush1.msra.mxu0 0.0
      %1294 = vmatprep.subr.mxu0 0.0
      %1295 = vmatpush1.msra.mxu0 0.0
      %1296 = vmatprep.subr.mxu0 0.0
      %1297 = vmatpush1.msra.mxu0 0.0
      %1298 = vmatprep.subr.mxu0 0.0
      %1299 = vmatpush1.msra.mxu0 0.0
      %1300 = vmatprep.subr.mxu0 0.0
      %1301 = vmatpush1.msra.mxu0 0.0
      %1302 = vmatprep.subr.mxu0 0.0
      %1303 = vmatpush1.msra.mxu0 0.0
      %1304 = vmatprep.subr.mxu0 0.0
      %1305 = vmatpush1.msra.mxu0 0.0
      %1306 = vmatprep.subr.mxu0 0.0
      %1307 = vmatpush1.msra.mxu0 0.0
      %1308 = vmatprep.subr.mxu0 0.0
      %1309 = vmatpush1.msra.mxu0 0.0
      %1310 = vmatprep.subr.mxu0 0.0
      %1311 = vmatpush1.msra.mxu0 0.0
      %1312 = vmatprep.subr.mxu0 0.0
      %1313 = vmatpush1.msra.mxu0 0.0
      %1314 = vmatprep.subr.mxu0 0.0
      %1315 = vmatpush1.msra.mxu0 0.0
      %1316 = vmatprep.subr.mxu0 0.0
      %1317 = vmatpush1.msra.mxu0 0.0
      %1318 = vmatprep.subr.mxu0 0.0
      %1319 = vmatpush1.msra.mxu0 0.0
      %1320 = vmatprep.subr.mxu0 0.0
      %1321 = vmatpush1.msra.mxu0 0.0
      %1322 = vmatprep.subr.mxu0 0.0
      %1323 = vmatpush1.msra.mxu0 0.0
      %1324 = vmatprep.subr.mxu0 0.0
      %1325 = vmatpush1.msra.mxu0 0.0
      %1326 = vmatprep.subr.mxu0 0.0
      %1327 = vmatpush1.msra.mxu0 0.0
      %1328 = vmatprep.subr.mxu0 0.0
      %1329 = vmatpush1.msra.mxu0 0.0
      %1330 = vmatprep.subr.mxu0 0.0
      %1331 = vmatpush1.msra.mxu0 0.0
      %1332 = vmatprep.subr.mxu0 0.0
      %1333 = vmatpush1.msra.mxu0 0.0
      %1334 = vmatprep.subr.mxu0 0.0
      %1335 = vmatpush1.msra.mxu0 0.0
      %1336 = vmatprep.subr.mxu0 0.0
      %1337 = vmatpush1.msra.mxu0 0.0
      %1338 = vmatprep.subr.mxu0 0.0
      %1339 = vmatpush1.msra.mxu0 0.0
      %1340 = vmatprep.subr.mxu0 0.0
      %1341 = vmatpush1.msra.mxu0 0.0
      %1342 = vmatprep.subr.mxu0 0.0
      %1343 = vmatpush1.msra.mxu0 0.0
      %1344 = vmatprep.subr.mxu0 0.0
      %1345 = vmatpush1.msra.mxu0 0.0
      %1346 = vmatprep.subr.mxu0 0.0
      %1347 = vmatpush1.msra.mxu0 0.0
      %1348 = vmatprep.mubr.f32.mxu0 0.0
      %1349 = vmatmul.mubr.f32.gmra.mrb[0].mxu0 %v1233
      %v1350 = vpop.f32.mrb[0].mxu0
      %v1351 = vadd.f32 0.0, %v1350
      %v1352 = vpop.f32.mrb[0].mxu0
      %1353 = vmatprep.mubr.f32.mxu0 0.0
      %1354 = vmatmul.mubr.f32.gmra.mrb[0].mxu0 %v1236
      %v1355 = vpop.f32.mrb[0].mxu0
      %v1356 = vadd.f32 0.0, %v1355
      %v1357 = vpop.f32.mrb[0].mxu0
      %1358 = vmatprep.mubr.f32.mxu0 0.0
      %1359 = vmatmul.mubr.f32.gmra.mrb[0].mxu0 %v1239
      %v1360 = vpop.f32.mrb[0].mxu0
      %v1361 = vadd.f32 0.0, %v1360
      %v1362 = vpop.f32.mrb[0].mxu0
      %1363 = vmatprep.mubr.f32.mxu0 0.0
      %1364 = vmatmul.mubr.f32.gmra.mrb[0].mxu0 %v1242
      %v1365 = vpop.f32.mrb[0].mxu0
      %v1366 = vadd.f32 0.0, %v1365
      %v1367 = vpop.f32.mrb[0].mxu0
      %1368 = vmatprep.mubr.f32.mxu0 0.0
      %1369 = vmatmul.mubr.f32.gmra.mrb[0].mxu0 %v1245
      %v1370 = vpop.f32.mrb[0].mxu0
      %v1371 = vadd.f32 0.0, %v1370
      %v1372 = vpop.f32.mrb[0].mxu0
      %1373 = vmatprep.mubr.f32.mxu0 0.0
      %1374 = vmatmul.mubr.f32.gmra.mrb[0].mxu0 %v1248
      %v1375 = vpop.f32.mrb[0].mxu0
      %v1376 = vadd.f32 0.0, %v1375
      %v1377 = vpop.f32.mrb[0].mxu0
      %1378 = vmatprep.mubr.f32.mxu0 0.0
      %1379 = vmatmul.mubr.f32.gmra.mrb[0].mxu0 %v1251
      %v1380 = vpop.f32.mrb[0].mxu0
      %v1381 = vadd.f32 0.0, %v1380
      %v1382 = vpop.f32.mrb[0].mxu0
      %1383 = vmatprep.mubr.f32.mxu0 0.0
      %1384 = vmatmul.mubr.f32.gmra.mrb[0].mxu0 %v1254
      %v1385 = vpop.f32.mrb[0].mxu0
      %v1386 = vadd.f32 0.0, %v1385
      %v1387 = vpop.f32.mrb[0].mxu0
      %1388 = vmatprep.mubr.f32.mxu0 0.0
      %1389 = vmatmul.mubr.f32.gmra.mrb[0].mxu0 %v1257
      %v1390 = vpop.f32.mrb[0].mxu0
      %v1391 = vadd.f32 0.0, %v1390
      %v1392 = vpop.f32.mrb[0].mxu0
      %1393 = vmatprep.mubr.f32.mxu0 0.0
      %1394 = vmatmul.mubr.f32.gmra.mrb[0].mxu0 %v1260
      %v1395 = vpop.f32.mrb[0].mxu0
      %v1396 = vadd.f32 0.0, %v1395
      %v1397 = vpop.f32.mrb[0].mxu0
      %1398 = vmatprep.mubr.f32.mxu0 0.0
      %1399 = vmatmul.mubr.f32.gmra.mrb[0].mxu0 %v1263
      %v1400 = vpop.f32.mrb[0].mxu0
      %v1401 = vadd.f32 0.0, %v1400
      %v1402 = vpop.f32.mrb[0].mxu0
      %1403 = vmatprep.mubr.f32.mxu0 0.0
      %1404 = vmatmul.mubr.f32.gmra.mrb[0].mxu0 %v1266
      %v1405 = vpop.f32.mrb[0].mxu0
      %v1406 = vadd.f32 0.0, %v1405
      %v1407 = vpop.f32.mrb[0].mxu0
      %1408 = vmatprep.mubr.f32.mxu0 0.0
      %1409 = vmatmul.mubr.f32.gmra.mrb[0].mxu0 %v1269
      %v1410 = vpop.f32.mrb[0].mxu0
      %v1411 = vadd.f32 0.0, %v1410
      %v1412 = vpop.f32.mrb[0].mxu0
      %1413 = vmatprep.mubr.f32.mxu0 0.0
      %1414 = vmatmul.mubr.f32.gmra.mrb[0].mxu0 %v1272
      %v1415 = vpop.f32.mrb[0].mxu0
      %v1416 = vadd.f32 0.0, %v1415
      %v1417 = vpop.f32.mrb[0].mxu0
      %1418 = vmatprep.mubr.f32.mxu0 0.0
      %1419 = vmatmul.mubr.f32.gmra.mrb[0].mxu0 %v1275
      %v1420 = vpop.f32.mrb[0].mxu0
      %v1421 = vadd.f32 0.0, %v1420
      %v1422 = vpop.f32.mrb[0].mxu0
      %1423 = vmatprep.mubr.f32.mxu0 0.0
      %1424 = vmatmul.mubr.f32.gmra.mrb[0].mxu0 %v1278
      %v1425 = vpop.f32.mrb[0].mxu0
      %v1426 = vadd.f32 0.0, %v1425
      %v1427 = vpop.f32.mrb[0].mxu0
      %1428 = vdwg.mxu0
      %v1430 = vsel %vm1231, %v1209, 0
      %v1433 = vsel %vm1231, %v1210, 0
      %v1436 = vsel %vm1231, %v1211, 0
      %v1439 = vsel %vm1231, %v1212, 0
      %v1442 = vsel %vm1231, %v1213, 0
      %v1445 = vsel %vm1231, %v1214, 0
      %v1448 = vsel %vm1231, %v1215, 0
      %v1451 = vsel %vm1231, %v1216, 0
      %v1454 = vsel %vm1231, %v1217, 0
      %v1457 = vsel %vm1231, %v1218, 0
      %v1460 = vsel %vm1231, %v1219, 0
      %v1463 = vsel %vm1231, %v1220, 0
      %v1466 = vsel %vm1231, %v1221, 0
      %v1469 = vsel %vm1231, %v1222, 0
      %v1472 = vsel %vm1231, %v1223, 0
      %v1475 = vsel %vm1231, %v1224, 0
      %1477 = vmatprep.subr.mxu0 0.0
      %1478 = vmatpush1.msra.mxu0 %v1229
      %1479 = vmatprep.subr.mxu0 0.0
      %1480 = vmatpush1.msra.mxu0 %v1282
      %1481 = vmatprep.subr.mxu0 0.0
      %1482 = vmatpush1.msra.mxu0 0.0
      %1483 = vmatprep.subr.mxu0 0.0
      %1484 = vmatpush1.msra.mxu0 0.0
      %1485 = vmatprep.subr.mxu0 0.0
      %1486 = vmatpush1.msra.mxu0 0.0
      %1487 = vmatprep.subr.mxu0 0.0
      %1488 = vmatpush1.msra.mxu0 0.0
      %1489 = vmatprep.subr.mxu0 0.0
      %1490 = vmatpush1.msra.mxu0 0.0
      %1491 = vmatprep.subr.mxu0 0.0
      %1492 = vmatpush1.msra.mxu0 0.0
      %1493 = vmatprep.subr.mxu0 0.0
      %1494 = vmatpush1.msra.mxu0 0.0
      %1495 = vmatprep.subr.mxu0 0.0
      %1496 = vmatpush1.msra.mxu0 0.0
      %1497 = vmatprep.subr.mxu0 0.0
      %1498 = vmatpush1.msra.mxu0 0.0
      %1499 = vmatprep.subr.mxu0 0.0
      %1500 = vmatpush1.msra.mxu0 0.0
      %1501 = vmatprep.subr.mxu0 0.0
      %1502 = vmatpush1.msra.mxu0 0.0
      %1503 = vmatprep.subr.mxu0 0.0
      %1504 = vmatpush1.msra.mxu0 0.0
      %1505 = vmatprep.subr.mxu0 0.0
      %1506 = vmatpush1.msra.mxu0 0.0
      %1507 = vmatprep.subr.mxu0 0.0
      %1508 = vmatpush1.msra.mxu0 0.0
      %1509 = vmatprep.subr.mxu0 0.0
      %1510 = vmatpush1.msra.mxu0 0.0
      %1511 = vmatprep.subr.mxu0 0.0
      %1512 = vmatpush1.msra.mxu0 0.0
      %1513 = vmatprep.subr.mxu0 0.0
      %1514 = vmatpush1.msra.mxu0 0.0
      %1515 = vmatprep.subr.mxu0 0.0
      %1516 = vmatpush1.msra.mxu0 0.0
      %1517 = vmatprep.subr.mxu0 0.0
      %1518 = vmatpush1.msra.mxu0 0.0
      %1519 = vmatprep.subr.mxu0 0.0
      %1520 = vmatpush1.msra.mxu0 0.0
      %1521 = vmatprep.subr.mxu0 0.0
      %1522 = vmatpush1.msra.mxu0 0.0
      %1523 = vmatprep.subr.mxu0 0.0
      %1524 = vmatpush1.msra.mxu0 0.0
      %1525 = vmatprep.subr.mxu0 0.0
      %1526 = vmatpush1.msra.mxu0 0.0
      %1527 = vmatprep.subr.mxu0 0.0
      %1528 = vmatpush1.msra.mxu0 0.0
      %1529 = vmatprep.subr.mxu0 0.0
      %1530 = vmatpush1.msra.mxu0 0.0
      %1531 = vmatprep.subr.mxu0 0.0
      %1532 = vmatpush1.msra.mxu0 0.0
      %1533 = vmatprep.subr.mxu0 0.0
      %1534 = vmatpush1.msra.mxu0 0.0
      %1535 = vmatprep.subr.mxu0 0.0
      %1536 = vmatpush1.msra.mxu0 0.0
      %1537 = vmatprep.subr.mxu0 0.0
      %1538 = vmatpush1.msra.mxu0 0.0
      %1539 = vmatprep.subr.mxu0 0.0
      %1540 = vmatpush1.msra.mxu0 0.0
      %1541 = vmatprep.mubr.f32.mxu0 0.0
      %1542 = vmatmul.mubr.f32.gmra.mrb[0].mxu0 %v1430
      %v1543 = vpop.f32.mrb[0].mxu0
      %v1544 = vadd.f32 0.0, %v1543
      %v1545 = vpop.f32.mrb[0].mxu0
      %1546 = vmatprep.mubr.f32.mxu0 0.0
      %1547 = vmatmul.mubr.f32.gmra.mrb[0].mxu0 %v1433
      %v1548 = vpop.f32.mrb[0].mxu0
      %v1549 = vadd.f32 0.0, %v1548
      %v1550 = vpop.f32.mrb[0].mxu0
      %1551 = vmatprep.mubr.f32.mxu0 0.0
      %1552 = vmatmul.mubr.f32.gmra.mrb[0].mxu0 %v1436
      %v1553 = vpop.f32.mrb[0].mxu0
      %v1554 = vadd.f32 0.0, %v1553
      %v1555 = vpop.f32.mrb[0].mxu0
      %1556 = vmatprep.mubr.f32.mxu0 0.0
      %1557 = vmatmul.mubr.f32.gmra.mrb[0].mxu0 %v1439
      %v1558 = vpop.f32.mrb[0].mxu0
      %v1559 = vadd.f32 0.0, %v1558
      %v1560 = vpop.f32.mrb[0].mxu0
      %1561 = vmatprep.mubr.f32.mxu0 0.0
      %1562 = vmatmul.mubr.f32.gmra.mrb[0].mxu0 %v1442
      %v1563 = vpop.f32.mrb[0].mxu0
      %v1564 = vadd.f32 0.0, %v1563
      %v1565 = vpop.f32.mrb[0].mxu0
      %1566 = vmatprep.mubr.f32.mxu0 0.0
      %1567 = vmatmul.mubr.f32.gmra.mrb[0].mxu0 %v1445
      %v1568 = vpop.f32.mrb[0].mxu0
      %v1569 = vadd.f32 0.0, %v1568
      %v1570 = vpop.f32.mrb[0].mxu0
      %1571 = vmatprep.mubr.f32.mxu0 0.0
      %1572 = vmatmul.mubr.f32.gmra.mrb[0].mxu0 %v1448
      %v1573 = vpop.f32.mrb[0].mxu0
      %v1574 = vadd.f32 0.0, %v1573
      %v1575 = vpop.f32.mrb[0].mxu0
      %1576 = vmatprep.mubr.f32.mxu0 0.0
      %1577 = vmatmul.mubr.f32.gmra.mrb[0].mxu0 %v1451
      %v1578 = vpop.f32.mrb[0].mxu0
      %v1579 = vadd.f32 0.0, %v1578
      %v1580 = vpop.f32.mrb[0].mxu0
      %1581 = vmatprep.mubr.f32.mxu0 0.0
      %1582 = vmatmul.mubr.f32.gmra.mrb[0].mxu0 %v1454
      %v1583 = vpop.f32.mrb[0].mxu0
      %v1584 = vadd.f32 0.0, %v1583
      %v1585 = vpop.f32.mrb[0].mxu0
      %1586 = vmatprep.mubr.f32.mxu0 0.0
      %1587 = vmatmul.mubr.f32.gmra.mrb[0].mxu0 %v1457
      %v1588 = vpop.f32.mrb[0].mxu0
      %v1589 = vadd.f32 0.0, %v1588
      %v1590 = vpop.f32.mrb[0].mxu0
      %1591 = vmatprep.mubr.f32.mxu0 0.0
      %1592 = vmatmul.mubr.f32.gmra.mrb[0].mxu0 %v1460
      %v1593 = vpop.f32.mrb[0].mxu0
      %v1594 = vadd.f32 0.0, %v1593
      %v1595 = vpop.f32.mrb[0].mxu0
      %1596 = vmatprep.mubr.f32.mxu0 0.0
      %1597 = vmatmul.mubr.f32.gmra.mrb[0].mxu0 %v1463
      %v1598 = vpop.f32.mrb[0].mxu0
      %v1599 = vadd.f32 0.0, %v1598
      %v1600 = vpop.f32.mrb[0].mxu0
      %1601 = vmatprep.mubr.f32.mxu0 0.0
      %1602 = vmatmul.mubr.f32.gmra.mrb[0].mxu0 %v1466
      %v1603 = vpop.f32.mrb[0].mxu0
      %v1604 = vadd.f32 0.0, %v1603
      %v1605 = vpop.f32.mrb[0].mxu0
      %1606 = vmatprep.mubr.f32.mxu0 0.0
      %1607 = vmatmul.mubr.f32.gmra.mrb[0].mxu0 %v1469
      %v1608 = vpop.f32.mrb[0].mxu0
      %v1609 = vadd.f32 0.0, %v1608
      %v1610 = vpop.f32.mrb[0].mxu0
      %1611 = vmatprep.mubr.f32.mxu0 0.0
      %1612 = vmatmul.mubr.f32.gmra.mrb[0].mxu0 %v1472
      %v1613 = vpop.f32.mrb[0].mxu0
      %v1614 = vadd.f32 0.0, %v1613
      %v1615 = vpop.f32.mrb[0].mxu0
      %1616 = vmatprep.mubr.f32.mxu0 0.0
      %1617 = vmatmul.mubr.f32.gmra.mrb[0].mxu0 %v1475
      %v1618 = vpop.f32.mrb[0].mxu0
      %v1619 = vadd.f32 0.0, %v1618
      %v1620 = vpop.f32.mrb[0].mxu0
      %1621 = vdwg.mxu0
      %1622 = vst.msk [vmem:[#allocation2] sm:$0xff] %vm1038, %v1351
      %1623 = vst.msk [vmem:[#allocation2 + $0x8] sm:$0xff] %vm1038, %v1356
      %1624 = vst.msk [vmem:[#allocation2 + $0x10] sm:$0xff] %vm1038, %v1361
      %1625 = vst.msk [vmem:[#allocation2 + $0x18] sm:$0xff] %vm1038, %v1366
      %1626 = vst.msk [vmem:[#allocation2 + $0x20] sm:$0xff] %vm1038, %v1371
      %1627 = vst.msk [vmem:[#allocation2 + $0x28] sm:$0xff] %vm1038, %v1376
      %1628 = vst.msk [vmem:[#allocation2 + $0x30] sm:$0xff] %vm1038, %v1381
      %1629 = vst.msk [vmem:[#allocation2 + $0x38] sm:$0xff] %vm1038, %v1386
      %1630 = vst.msk [vmem:[#allocation2 + $0x40] sm:$0xff] %vm1038, %v1391
      %1631 = vst.msk [vmem:[#allocation2 + $0x48] sm:$0xff] %vm1038, %v1396
      %1632 = vst.msk [vmem:[#allocation2 + $0x50] sm:$0xff] %vm1038, %v1401
      %1633 = vst.msk [vmem:[#allocation2 + $0x58] sm:$0xff] %vm1038, %v1406
      %1634 = vst.msk [vmem:[#allocation2 + $0x60] sm:$0xff] %vm1038, %v1411
      %1635 = vst.msk [vmem:[#allocation2 + $0x68] sm:$0xff] %vm1038, %v1416
      %1636 = vst.msk [vmem:[#allocation2 + $0x70] sm:$0xff] %vm1038, %v1421
      %1637 = vst.msk [vmem:[#allocation2 + $0x78] sm:$0xff] %vm1038, %v1426
      %1638 = vst.msk [vmem:[#allocation3] sm:$0xff] %vm1038, %v1544
      %1639 = vst.msk [vmem:[#allocation3 + $0x8] sm:$0xff] %vm1038, %v1549
      %1640 = vst.msk [vmem:[#allocation3 + $0x10] sm:$0xff] %vm1038, %v1554
      %1641 = vst.msk [vmem:[#allocation3 + $0x18] sm:$0xff] %vm1038, %v1559
      %1642 = vst.msk [vmem:[#allocation3 + $0x20] sm:$0xff] %vm1038, %v1564
      %1643 = vst.msk [vmem:[#allocation3 + $0x28] sm:$0xff] %vm1038, %v1569
      %1644 = vst.msk [vmem:[#allocation3 + $0x30] sm:$0xff] %vm1038, %v1574
      %1645 = vst.msk [vmem:[#allocation3 + $0x38] sm:$0xff] %vm1038, %v1579
      %1646 = vst.msk [vmem:[#allocation3 + $0x40] sm:$0xff] %vm1038, %v1584
      %1647 = vst.msk [vmem:[#allocation3 + $0x48] sm:$0xff] %vm1038, %v1589
      %1648 = vst.msk [vmem:[#allocation3 + $0x50] sm:$0xff] %vm1038, %v1594
      %1649 = vst.msk [vmem:[#allocation3 + $0x58] sm:$0xff] %vm1038, %v1599
      %1650 = vst.msk [vmem:[#allocation3 + $0x60] sm:$0xff] %vm1038, %v1604
      %1651 = vst.msk [vmem:[#allocation3 + $0x68] sm:$0xff] %vm1038, %v1609
      %1652 = vst.msk [vmem:[#allocation3 + $0x70] sm:$0xff] %vm1038, %v1614
      %1653 = vst.msk [vmem:[#allocation3 + $0x78] sm:$0xff] %vm1038, %v1619
      %s1654 = scalar_lea.vmem %s1, 16
      %v1655 = vld [vmem:[%s1654] sm:$0xff]
      %v1656 = vld [vmem:[%s1654 + $0x8] sm:$0xf]
      %v1658 = vsel %vm1231, %v1055, 0
      %v1661 = vsel %vm1231, %v1056, 0
      %v1664 = vsel %vm1280, %v1656, 0
      %1666 = vmatprep.subr.mxu0 0.0
      %1667 = vmatpush1.msra.mxu0 %v1655
      %1668 = vmatprep.subr.mxu0 0.0
      %1669 = vmatpush1.msra.mxu0 %v1664
      %1670 = vmatprep.subr.mxu0 0.0
      %1671 = vmatpush1.msra.mxu0 0.0
      %1672 = vmatprep.subr.mxu0 0.0
      %1673 = vmatpush1.msra.mxu0 0.0
      %1674 = vmatprep.subr.mxu0 0.0
      %1675 = vmatpush1.msra.mxu0 0.0
      %1676 = vmatprep.subr.mxu0 0.0
      %1677 = vmatpush1.msra.mxu0 0.0
      %1678 = vmatprep.subr.mxu0 0.0
      %1679 = vmatpush1.msra.mxu0 0.0
      %1680 = vmatprep.subr.mxu0 0.0
      %1681 = vmatpush1.msra.mxu0 0.0
      %1682 = vmatprep.subr.mxu0 0.0
      %1683 = vmatpush1.msra.mxu0 0.0
      %1684 = vmatprep.subr.mxu0 0.0
      %1685 = vmatpush1.msra.mxu0 0.0
      %1686 = vmatprep.subr.mxu0 0.0
      %1687 = vmatpush1.msra.mxu0 0.0
      %1688 = vmatprep.subr.mxu0 0.0
      %1689 = vmatpush1.msra.mxu0 0.0
      %1690 = vmatprep.subr.mxu0 0.0
      %1691 = vmatpush1.msra.mxu0 0.0
      %1692 = vmatprep.subr.mxu0 0.0
      %1693 = vmatpush1.msra.mxu0 0.0
      %1694 = vmatprep.subr.mxu0 0.0
      %1695 = vmatpush1.msra.mxu0 0.0
      %1696 = vmatprep.subr.mxu0 0.0
      %1697 = vmatpush1.msra.mxu0 0.0
      %1698 = vmatprep.subr.mxu0 0.0
      %1699 = vmatpush1.msra.mxu0 0.0
      %1700 = vmatprep.subr.mxu0 0.0
      %1701 = vmatpush1.msra.mxu0 0.0
      %1702 = vmatprep.subr.mxu0 0.0
      %1703 = vmatpush1.msra.mxu0 0.0
      %1704 = vmatprep.subr.mxu0 0.0
      %1705 = vmatpush1.msra.mxu0 0.0
      %1706 = vmatprep.subr.mxu0 0.0
      %1707 = vmatpush1.msra.mxu0 0.0
      %1708 = vmatprep.subr.mxu0 0.0
      %1709 = vmatpush1.msra.mxu0 0.0
      %1710 = vmatprep.subr.mxu0 0.0
      %1711 = vmatpush1.msra.mxu0 0.0
      %1712 = vmatprep.subr.mxu0 0.0
      %1713 = vmatpush1.msra.mxu0 0.0
      %1714 = vmatprep.subr.mxu0 0.0
      %1715 = vmatpush1.msra.mxu0 0.0
      %1716 = vmatprep.subr.mxu0 0.0
      %1717 = vmatpush1.msra.mxu0 0.0
      %1718 = vmatprep.subr.mxu0 0.0
      %1719 = vmatpush1.msra.mxu0 0.0
      %1720 = vmatprep.subr.mxu0 0.0
      %1721 = vmatpush1.msra.mxu0 0.0
      %1722 = vmatprep.subr.mxu0 0.0
      %1723 = vmatpush1.msra.mxu0 0.0
      %1724 = vmatprep.subr.mxu0 0.0
      %1725 = vmatpush1.msra.mxu0 0.0
      %1726 = vmatprep.subr.mxu0 0.0
      %1727 = vmatpush1.msra.mxu0 0.0
      %1728 = vmatprep.subr.mxu0 0.0
      %1729 = vmatpush1.msra.mxu0 0.0
      %1730 = vmatprep.mubr.f32.mxu0 0.0
      %1731 = vmatmul.mubr.f32.gmra.mrb[0].mxu0 %v1239
      %v1732 = vpop.f32.mrb[0].mxu0
      %v1733 = vadd.f32 0.0, %v1732
      %v1734 = vpop.f32.mrb[0].mxu0
      %1735 = vmatprep.mubr.f32.mxu0 0.0
      %1736 = vmatmul.mubr.f32.gmra.mrb[0].mxu0 %v1242
      %v1737 = vpop.f32.mrb[0].mxu0
      %v1738 = vadd.f32 0.0, %v1737
      %v1739 = vpop.f32.mrb[0].mxu0
      %1740 = vmatprep.mubr.f32.mxu0 0.0
      %1741 = vmatmul.mubr.f32.gmra.mrb[0].mxu0 %v1245
      %v1742 = vpop.f32.mrb[0].mxu0
      %v1743 = vadd.f32 0.0, %v1742
      %v1744 = vpop.f32.mrb[0].mxu0
      %1745 = vmatprep.mubr.f32.mxu0 0.0
      %1746 = vmatmul.mubr.f32.gmra.mrb[0].mxu0 %v1248
      %v1747 = vpop.f32.mrb[0].mxu0
      %v1748 = vadd.f32 0.0, %v1747
      %v1749 = vpop.f32.mrb[0].mxu0
      %1750 = vmatprep.mubr.f32.mxu0 0.0
      %1751 = vmatmul.mubr.f32.gmra.mrb[0].mxu0 %v1251
      %v1752 = vpop.f32.mrb[0].mxu0
      %v1753 = vadd.f32 0.0, %v1752
      %v1754 = vpop.f32.mrb[0].mxu0
      %1755 = vmatprep.mubr.f32.mxu0 0.0
      %1756 = vmatmul.mubr.f32.gmra.mrb[0].mxu0 %v1254
      %v1757 = vpop.f32.mrb[0].mxu0
      %v1758 = vadd.f32 0.0, %v1757
      %v1759 = vpop.f32.mrb[0].mxu0
      %1760 = vmatprep.mubr.f32.mxu0 0.0
      %1761 = vmatmul.mubr.f32.gmra.mrb[0].mxu0 %v1257
      %v1762 = vpop.f32.mrb[0].mxu0
      %v1763 = vadd.f32 0.0, %v1762
      %v1764 = vpop.f32.mrb[0].mxu0
      %1765 = vmatprep.mubr.f32.mxu0 0.0
      %1766 = vmatmul.mubr.f32.gmra.mrb[0].mxu0 %v1260
      %v1767 = vpop.f32.mrb[0].mxu0
      %v1768 = vadd.f32 0.0, %v1767
      %v1769 = vpop.f32.mrb[0].mxu0
      %1770 = vmatprep.mubr.f32.mxu0 0.0
      %1771 = vmatmul.mubr.f32.gmra.mrb[0].mxu0 %v1263
      %v1772 = vpop.f32.mrb[0].mxu0
      %v1773 = vadd.f32 0.0, %v1772
      %v1774 = vpop.f32.mrb[0].mxu0
      %1775 = vmatprep.mubr.f32.mxu0 0.0
      %1776 = vmatmul.mubr.f32.gmra.mrb[0].mxu0 %v1266
      %v1777 = vpop.f32.mrb[0].mxu0
      %v1778 = vadd.f32 0.0, %v1777
      %v1779 = vpop.f32.mrb[0].mxu0
      %1780 = vmatprep.mubr.f32.mxu0 0.0
      %1781 = vmatmul.mubr.f32.gmra.mrb[0].mxu0 %v1269
      %v1782 = vpop.f32.mrb[0].mxu0
      %v1783 = vadd.f32 0.0, %v1782
      %v1784 = vpop.f32.mrb[0].mxu0
      %1785 = vmatprep.mubr.f32.mxu0 0.0
      %1786 = vmatmul.mubr.f32.gmra.mrb[0].mxu0 %v1272
      %v1787 = vpop.f32.mrb[0].mxu0
      %v1788 = vadd.f32 0.0, %v1787
      %v1789 = vpop.f32.mrb[0].mxu0
      %1790 = vmatprep.mubr.f32.mxu0 0.0
      %1791 = vmatmul.mubr.f32.gmra.mrb[0].mxu0 %v1275
      %v1792 = vpop.f32.mrb[0].mxu0
      %v1793 = vadd.f32 0.0, %v1792
      %v1794 = vpop.f32.mrb[0].mxu0
      %1795 = vmatprep.mubr.f32.mxu0 0.0
      %1796 = vmatmul.mubr.f32.gmra.mrb[0].mxu0 %v1278
      %v1797 = vpop.f32.mrb[0].mxu0
      %v1798 = vadd.f32 0.0, %v1797
      %v1799 = vpop.f32.mrb[0].mxu0
      %1800 = vmatprep.mubr.f32.mxu0 0.0
      %1801 = vmatmul.mubr.f32.gmra.mrb[0].mxu0 %v1658
      %v1802 = vpop.f32.mrb[0].mxu0
      %v1803 = vadd.f32 0.0, %v1802
      %v1804 = vpop.f32.mrb[0].mxu0
      %1805 = vmatprep.mubr.f32.mxu0 0.0
      %1806 = vmatmul.mubr.f32.gmra.mrb[0].mxu0 %v1661
      %v1807 = vpop.f32.mrb[0].mxu0
      %v1808 = vadd.f32 0.0, %v1807
      %v1809 = vpop.f32.mrb[0].mxu0
      %1810 = vdwg.mxu0
      %v1812 = vsel %vm1231, %v1225, 0
      %v1815 = vsel %vm1231, %v1226, 0
      %1817 = vmatprep.subr.mxu0 0.0
      %1818 = vmatpush1.msra.mxu0 %v1655
      %1819 = vmatprep.subr.mxu0 0.0
      %1820 = vmatpush1.msra.mxu0 %v1664
      %1821 = vmatprep.subr.mxu0 0.0
      %1822 = vmatpush1.msra.mxu0 0.0
      %1823 = vmatprep.subr.mxu0 0.0
      %1824 = vmatpush1.msra.mxu0 0.0
      %1825 = vmatprep.subr.mxu0 0.0
      %1826 = vmatpush1.msra.mxu0 0.0
      %1827 = vmatprep.subr.mxu0 0.0
      %1828 = vmatpush1.msra.mxu0 0.0
      %1829 = vmatprep.subr.mxu0 0.0
      %1830 = vmatpush1.msra.mxu0 0.0
      %1831 = vmatprep.subr.mxu0 0.0
      %1832 = vmatpush1.msra.mxu0 0.0
      %1833 = vmatprep.subr.mxu0 0.0
      %1834 = vmatpush1.msra.mxu0 0.0
      %1835 = vmatprep.subr.mxu0 0.0
      %1836 = vmatpush1.msra.mxu0 0.0
      %1837 = vmatprep.subr.mxu0 0.0
      %1838 = vmatpush1.msra.mxu0 0.0
      %1839 = vmatprep.subr.mxu0 0.0
      %1840 = vmatpush1.msra.mxu0 0.0
      %1841 = vmatprep.subr.mxu0 0.0
      %1842 = vmatpush1.msra.mxu0 0.0
      %1843 = vmatprep.subr.mxu0 0.0
      %1844 = vmatpush1.msra.mxu0 0.0
      %1845 = vmatprep.subr.mxu0 0.0
      %1846 = vmatpush1.msra.mxu0 0.0
      %1847 = vmatprep.subr.mxu0 0.0
      %1848 = vmatpush1.msra.mxu0 0.0
      %1849 = vmatprep.subr.mxu0 0.0
      %1850 = vmatpush1.msra.mxu0 0.0
      %1851 = vmatprep.subr.mxu0 0.0
      %1852 = vmatpush1.msra.mxu0 0.0
      %1853 = vmatprep.subr.mxu0 0.0
      %1854 = vmatpush1.msra.mxu0 0.0
      %1855 = vmatprep.subr.mxu0 0.0
      %1856 = vmatpush1.msra.mxu0 0.0
      %1857 = vmatprep.subr.mxu0 0.0
      %1858 = vmatpush1.msra.mxu0 0.0
      %1859 = vmatprep.subr.mxu0 0.0
      %1860 = vmatpush1.msra.mxu0 0.0
      %1861 = vmatprep.subr.mxu0 0.0
      %1862 = vmatpush1.msra.mxu0 0.0
      %1863 = vmatprep.subr.mxu0 0.0
      %1864 = vmatpush1.msra.mxu0 0.0
      %1865 = vmatprep.subr.mxu0 0.0
      %1866 = vmatpush1.msra.mxu0 0.0
      %1867 = vmatprep.subr.mxu0 0.0
      %1868 = vmatpush1.msra.mxu0 0.0
      %1869 = vmatprep.subr.mxu0 0.0
      %1870 = vmatpush1.msra.mxu0 0.0
      %1871 = vmatprep.subr.mxu0 0.0
      %1872 = vmatpush1.msra.mxu0 0.0
      %1873 = vmatprep.subr.mxu0 0.0
      %1874 = vmatpush1.msra.mxu0 0.0
      %1875 = vmatprep.subr.mxu0 0.0
      %1876 = vmatpush1.msra.mxu0 0.0
      %1877 = vmatprep.subr.mxu0 0.0
      %1878 = vmatpush1.msra.mxu0 0.0
      %1879 = vmatprep.subr.mxu0 0.0
      %1880 = vmatpush1.msra.mxu0 0.0
      %1881 = vmatprep.mubr.f32.mxu0 0.0
      %1882 = vmatmul.mubr.f32.gmra.mrb[0].mxu0 %v1436
      %v1883 = vpop.f32.mrb[0].mxu0
      %v1884 = vadd.f32 0.0, %v1883
      %v1885 = vpop.f32.mrb[0].mxu0
      %1886 = vmatprep.mubr.f32.mxu0 0.0
      %1887 = vmatmul.mubr.f32.gmra.mrb[0].mxu0 %v1439
      %v1888 = vpop.f32.mrb[0].mxu0
      %v1889 = vadd.f32 0.0, %v1888
      %v1890 = vpop.f32.mrb[0].mxu0
      %1891 = vmatprep.mubr.f32.mxu0 0.0
      %1892 = vmatmul.mubr.f32.gmra.mrb[0].mxu0 %v1442
      %v1893 = vpop.f32.mrb[0].mxu0
      %v1894 = vadd.f32 0.0, %v1893
      %v1895 = vpop.f32.mrb[0].mxu0
      %1896 = vmatprep.mubr.f32.mxu0 0.0
      %1897 = vmatmul.mubr.f32.gmra.mrb[0].mxu0 %v1445
      %v1898 = vpop.f32.mrb[0].mxu0
      %v1899 = vadd.f32 0.0, %v1898
      %v1900 = vpop.f32.mrb[0].mxu0
      %1901 = vmatprep.mubr.f32.mxu0 0.0
      %1902 = vmatmul.mubr.f32.gmra.mrb[0].mxu0 %v1448
      %v1903 = vpop.f32.mrb[0].mxu0
      %v1904 = vadd.f32 0.0, %v1903
      %v1905 = vpop.f32.mrb[0].mxu0
      %1906 = vmatprep.mubr.f32.mxu0 0.0
      %1907 = vmatmul.mubr.f32.gmra.mrb[0].mxu0 %v1451
      %v1908 = vpop.f32.mrb[0].mxu0
      %v1909 = vadd.f32 0.0, %v1908
      %v1910 = vpop.f32.mrb[0].mxu0
      %1911 = vmatprep.mubr.f32.mxu0 0.0
      %1912 = vmatmul.mubr.f32.gmra.mrb[0].mxu0 %v1454
      %v1913 = vpop.f32.mrb[0].mxu0
      %v1914 = vadd.f32 0.0, %v1913
      %v1915 = vpop.f32.mrb[0].mxu0
      %1916 = vmatprep.mubr.f32.mxu0 0.0
      %1917 = vmatmul.mubr.f32.gmra.mrb[0].mxu0 %v1457
      %v1918 = vpop.f32.mrb[0].mxu0
      %v1919 = vadd.f32 0.0, %v1918
      %v1920 = vpop.f32.mrb[0].mxu0
      %1921 = vmatprep.mubr.f32.mxu0 0.0
      %1922 = vmatmul.mubr.f32.gmra.mrb[0].mxu0 %v1460
      %v1923 = vpop.f32.mrb[0].mxu0
      %v1924 = vadd.f32 0.0, %v1923
      %v1925 = vpop.f32.mrb[0].mxu0
      %1926 = vmatprep.mubr.f32.mxu0 0.0
      %1927 = vmatmul.mubr.f32.gmra.mrb[0].mxu0 %v1463
      %v1928 = vpop.f32.mrb[0].mxu0
      %v1929 = vadd.f32 0.0, %v1928
      %v1930 = vpop.f32.mrb[0].mxu0
      %1931 = vmatprep.mubr.f32.mxu0 0.0
      %1932 = vmatmul.mubr.f32.gmra.mrb[0].mxu0 %v1466
      %v1933 = vpop.f32.mrb[0].mxu0
      %v1934 = vadd.f32 0.0, %v1933
      %v1935 = vpop.f32.mrb[0].mxu0
      %1936 = vmatprep.mubr.f32.mxu0 0.0
      %1937 = vmatmul.mubr.f32.gmra.mrb[0].mxu0 %v1469
      %v1938 = vpop.f32.mrb[0].mxu0
      %v1939 = vadd.f32 0.0, %v1938
      %v1940 = vpop.f32.mrb[0].mxu0
      %1941 = vmatprep.mubr.f32.mxu0 0.0
      %1942 = vmatmul.mubr.f32.gmra.mrb[0].mxu0 %v1472
      %v1943 = vpop.f32.mrb[0].mxu0
      %v1944 = vadd.f32 0.0, %v1943
      %v1945 = vpop.f32.mrb[0].mxu0
      %1946 = vmatprep.mubr.f32.mxu0 0.0
      %1947 = vmatmul.mubr.f32.gmra.mrb[0].mxu0 %v1475
      %v1948 = vpop.f32.mrb[0].mxu0
      %v1949 = vadd.f32 0.0, %v1948
      %v1950 = vpop.f32.mrb[0].mxu0
      %1951 = vmatprep.mubr.f32.mxu0 0.0
      %1952 = vmatmul.mubr.f32.gmra.mrb[0].mxu0 %v1812
      %v1953 = vpop.f32.mrb[0].mxu0
      %v1954 = vadd.f32 0.0, %v1953
      %v1955 = vpop.f32.mrb[0].mxu0
      %1956 = vmatprep.mubr.f32.mxu0 0.0
      %1957 = vmatmul.mubr.f32.gmra.mrb[0].mxu0 %v1815
      %v1958 = vpop.f32.mrb[0].mxu0
      %v1959 = vadd.f32 0.0, %v1958
      %v1960 = vpop.f32.mrb[0].mxu0
      %1961 = vdwg.mxu0
      %v1962 = vld [vmem:[#allocation2] sm:$0xff]
      %v1963 = vld [vmem:[#allocation2 + $0x8] sm:$0xff]
      %v1964 = vld [vmem:[#allocation2 + $0x10] sm:$0xff]
      %v1965 = vld [vmem:[#allocation2 + $0x18] sm:$0xff]
      %v1966 = vld [vmem:[#allocation2 + $0x20] sm:$0xff]
      %v1967 = vld [vmem:[#allocation2 + $0x28] sm:$0xff]
      %v1968 = vld [vmem:[#allocation2 + $0x30] sm:$0xff]
      %v1969 = vld [vmem:[#allocation2 + $0x38] sm:$0xff]
      %v1970 = vld [vmem:[#allocation2 + $0x40] sm:$0xff]
      %v1971 = vld [vmem:[#allocation2 + $0x48] sm:$0xff]
      %v1972 = vld [vmem:[#allocation2 + $0x50] sm:$0xff]
      %v1973 = vld [vmem:[#allocation2 + $0x58] sm:$0xff]
      %v1974 = vld [vmem:[#allocation2 + $0x60] sm:$0xff]
      %v1975 = vld [vmem:[#allocation2 + $0x68] sm:$0xff]
      %v1976 = vld [vmem:[#allocation2 + $0x70] sm:$0xff]
      %v1977 = vld [vmem:[#allocation2 + $0x78] sm:$0xff]
      %v1978 = vadd.f32 %v1962, %v1733
      %v1979 = vadd.f32 %v1963, %v1738
      %v1980 = vadd.f32 %v1964, %v1743
      %v1981 = vadd.f32 %v1965, %v1748
      %v1982 = vadd.f32 %v1966, %v1753
      %v1983 = vadd.f32 %v1967, %v1758
      %v1984 = vadd.f32 %v1968, %v1763
      %v1985 = vadd.f32 %v1969, %v1768
      %v1986 = vadd.f32 %v1970, %v1773
      %v1987 = vadd.f32 %v1971, %v1778
      %v1988 = vadd.f32 %v1972, %v1783
      %v1989 = vadd.f32 %v1973, %v1788
      %v1990 = vadd.f32 %v1974, %v1793
      %v1991 = vadd.f32 %v1975, %v1798
      %v1992 = vadd.f32 %v1976, %v1803
      %v1993 = vadd.f32 %v1977, %v1808
      %1994 = vst.msk [vmem:[#allocation2] sm:$0xff] %vm1038, %v1978
      %1995 = vst.msk [vmem:[#allocation2 + $0x8] sm:$0xff] %vm1038, %v1979
      %1996 = vst.msk [vmem:[#allocation2 + $0x10] sm:$0xff] %vm1038, %v1980
      %1997 = vst.msk [vmem:[#allocation2 + $0x18] sm:$0xff] %vm1038, %v1981
      %1998 = vst.msk [vmem:[#allocation2 + $0x20] sm:$0xff] %vm1038, %v1982
      %1999 = vst.msk [vmem:[#allocation2 + $0x28] sm:$0xff] %vm1038, %v1983
      %2000 = vst.msk [vmem:[#allocation2 + $0x30] sm:$0xff] %vm1038, %v1984
      %2001 = vst.msk [vmem:[#allocation2 + $0x38] sm:$0xff] %vm1038, %v1985
      %2002 = vst.msk [vmem:[#allocation2 + $0x40] sm:$0xff] %vm1038, %v1986
      %2003 = vst.msk [vmem:[#allocation2 + $0x48] sm:$0xff] %vm1038, %v1987
      %2004 = vst.msk [vmem:[#allocation2 + $0x50] sm:$0xff] %vm1038, %v1988
      %2005 = vst.msk [vmem:[#allocation2 + $0x58] sm:$0xff] %vm1038, %v1989
      %2006 = vst.msk [vmem:[#allocation2 + $0x60] sm:$0xff] %vm1038, %v1990
      %2007 = vst.msk [vmem:[#allocation2 + $0x68] sm:$0xff] %vm1038, %v1991
      %2008 = vst.msk [vmem:[#allocation2 + $0x70] sm:$0xff] %vm1038, %v1992
      %2009 = vst.msk [vmem:[#allocation2 + $0x78] sm:$0xff] %vm1038, %v1993
      %v2010 = vld [vmem:[#allocation3] sm:$0xff]
      %v2011 = vld [vmem:[#allocation3 + $0x8] sm:$0xff]
      %v2012 = vld [vmem:[#allocation3 + $0x10] sm:$0xff]
      %v2013 = vld [vmem:[#allocation3 + $0x18] sm:$0xff]
      %v2014 = vld [vmem:[#allocation3 + $0x20] sm:$0xff]
      %v2015 = vld [vmem:[#allocation3 + $0x28] sm:$0xff]
      %v2016 = vld [vmem:[#allocation3 + $0x30] sm:$0xff]
      %v2017 = vld [vmem:[#allocation3 + $0x38] sm:$0xff]
      %v2018 = vld [vmem:[#allocation3 + $0x40] sm:$0xff]
      %v2019 = vld [vmem:[#allocation3 + $0x48] sm:$0xff]
      %v2020 = vld [vmem:[#allocation3 + $0x50] sm:$0xff]
      %v2021 = vld [vmem:[#allocation3 + $0x58] sm:$0xff]
      %v2022 = vld [vmem:[#allocation3 + $0x60] sm:$0xff]
      %v2023 = vld [vmem:[#allocation3 + $0x68] sm:$0xff]
      %v2024 = vld [vmem:[#allocation3 + $0x70] sm:$0xff]
      %v2025 = vld [vmem:[#allocation3 + $0x78] sm:$0xff]
      %v2026 = vadd.f32 %v2010, %v1884
      %v2027 = vadd.f32 %v2011, %v1889
      %v2028 = vadd.f32 %v2012, %v1894
      %v2029 = vadd.f32 %v2013, %v1899
      %v2030 = vadd.f32 %v2014, %v1904
      %v2031 = vadd.f32 %v2015, %v1909
      %v2032 = vadd.f32 %v2016, %v1914
      %v2033 = vadd.f32 %v2017, %v1919
      %v2034 = vadd.f32 %v2018, %v1924
      %v2035 = vadd.f32 %v2019, %v1929
      %v2036 = vadd.f32 %v2020, %v1934
      %v2037 = vadd.f32 %v2021, %v1939
      %v2038 = vadd.f32 %v2022, %v1944
      %v2039 = vadd.f32 %v2023, %v1949
      %v2040 = vadd.f32 %v2024, %v1954
      %v2041 = vadd.f32 %v2025, %v1959
      %2042 = vst.msk [vmem:[#allocation3] sm:$0xff] %vm1038, %v2026
      %2043 = vst.msk [vmem:[#allocation3 + $0x8] sm:$0xff] %vm1038, %v2027
      %2044 = vst.msk [vmem:[#allocation3 + $0x10] sm:$0xff] %vm1038, %v2028
      %2045 = vst.msk [vmem:[#allocation3 + $0x18] sm:$0xff] %vm1038, %v2029
      %2046 = vst.msk [vmem:[#allocation3 + $0x20] sm:$0xff] %vm1038, %v2030
      %2047 = vst.msk [vmem:[#allocation3 + $0x28] sm:$0xff] %vm1038, %v2031
      %2048 = vst.msk [vmem:[#allocation3 + $0x30] sm:$0xff] %vm1038, %v2032
      %2049 = vst.msk [vmem:[#allocation3 + $0x38] sm:$0xff] %vm1038, %v2033
      %2050 = vst.msk [vmem:[#allocation3 + $0x40] sm:$0xff] %vm1038, %v2034
      %2051 = vst.msk [vmem:[#allocation3 + $0x48] sm:$0xff] %vm1038, %v2035
      %2052 = vst.msk [vmem:[#allocation3 + $0x50] sm:$0xff] %vm1038, %v2036
      %2053 = vst.msk [vmem:[#allocation3 + $0x58] sm:$0xff] %vm1038, %v2037
      %2054 = vst.msk [vmem:[#allocation3 + $0x60] sm:$0xff] %vm1038, %v2038
      %2055 = vst.msk [vmem:[#allocation3 + $0x68] sm:$0xff] %vm1038, %v2039
      %2056 = vst.msk [vmem:[#allocation3 + $0x70] sm:$0xff] %vm1038, %v2040
      %2057 = vst.msk [vmem:[#allocation3 + $0x78] sm:$0xff] %vm1038, %v2041
      %s2058 = scalar_lea.vmem %s1, 32
      %v2059 = vld [vmem:[%s2058] sm:$0xff]
      %v2060 = vld [vmem:[%s2058 + $0x8] sm:$0xf]
      %v2062 = vsel %vm1231, %v1057, 0
      %v2065 = vsel %vm1231, %v1058, 0
      %v2068 = vsel %vm1280, %v2060, 0
      %2070 = vmatprep.subr.mxu0 0.0
      %2071 = vmatpush1.msra.mxu0 %v2059
      %2072 = vmatprep.subr.mxu0 0.0
      %2073 = vmatpush1.msra.mxu0 %v2068
      %2074 = vmatprep.subr.mxu0 0.0
      %2075 = vmatpush1.msra.mxu0 0.0
      %2076 = vmatprep.subr.mxu0 0.0
      %2077 = vmatpush1.msra.mxu0 0.0
      %2078 = vmatprep.subr.mxu0 0.0
      %2079 = vmatpush1.msra.mxu0 0.0
      %2080 = vmatprep.subr.mxu0 0.0
      %2081 = vmatpush1.msra.mxu0 0.0
      %2082 = vmatprep.subr.mxu0 0.0
      %2083 = vmatpush1.msra.mxu0 0.0
      %2084 = vmatprep.subr.mxu0 0.0
      %2085 = vmatpush1.msra.mxu0 0.0
      %2086 = vmatprep.subr.mxu0 0.0
      %2087 = vmatpush1.msra.mxu0 0.0
      %2088 = vmatprep.subr.mxu0 0.0
      %2089 = vmatpush1.msra.mxu0 0.0
      %2090 = vmatprep.subr.mxu0 0.0
      %2091 = vmatpush1.msra.mxu0 0.0
      %2092 = vmatprep.subr.mxu0 0.0
      %2093 = vmatpush1.msra.mxu0 0.0
      %2094 = vmatprep.subr.mxu0 0.0
      %2095 = vmatpush1.msra.mxu0 0.0
      %2096 = vmatprep.subr.mxu0 0.0
      %2097 = vmatpush1.msra.mxu0 0.0
      %2098 = vmatprep.subr.mxu0 0.0
      %2099 = vmatpush1.msra.mxu0 0.0
      %2100 = vmatprep.subr.mxu0 0.0
      %2101 = vmatpush1.msra.mxu0 0.0
      %2102 = vmatprep.subr.mxu0 0.0
      %2103 = vmatpush1.msra.mxu0 0.0
      %2104 = vmatprep.subr.mxu0 0.0
      %2105 = vmatpush1.msra.mxu0 0.0
      %2106 = vmatprep.subr.mxu0 0.0
      %2107 = vmatpush1.msra.mxu0 0.0
      %2108 = vmatprep.subr.mxu0 0.0
      %2109 = vmatpush1.msra.mxu0 0.0
      %2110 = vmatprep.subr.mxu0 0.0
      %2111 = vmatpush1.msra.mxu0 0.0
      %2112 = vmatprep.subr.mxu0 0.0
      %2113 = vmatpush1.msra.mxu0 0.0
      %2114 = vmatprep.subr.mxu0 0.0
      %2115 = vmatpush1.msra.mxu0 0.0
      %2116 = vmatprep.subr.mxu0 0.0
      %2117 = vmatpush1.msra.mxu0 0.0
      %2118 = vmatprep.subr.mxu0 0.0
      %2119 = vmatpush1.msra.mxu0 0.0
      %2120 = vmatprep.subr.mxu0 0.0
      %2121 = vmatpush1.msra.mxu0 0.0
      %2122 = vmatprep.subr.mxu0 0.0
      %2123 = vmatpush1.msra.mxu0 0.0
      %2124 = vmatprep.subr.mxu0 0.0
      %2125 = vmatpush1.msra.mxu0 0.0
      %2126 = vmatprep.subr.mxu0 0.0
      %2127 = vmatpush1.msra.mxu0 0.0
      %2128 = vmatprep.subr.mxu0 0.0
      %2129 = vmatpush1.msra.mxu0 0.0
      %2130 = vmatprep.subr.mxu0 0.0
      %2131 = vmatpush1.msra.mxu0 0.0
      %2132 = vmatprep.subr.mxu0 0.0
      %2133 = vmatpush1.msra.mxu0 0.0
      %2134 = vmatprep.mubr.f32.mxu0 0.0
      %2135 = vmatmul.mubr.f32.gmra.mrb[0].mxu0 %v1245
      %v2136 = vpop.f32.mrb[0].mxu0
      %v2137 = vadd.f32 0.0, %v2136
      %v2138 = vpop.f32.mrb[0].mxu0
      %2139 = vmatprep.mubr.f32.mxu0 0.0
      %2140 = vmatmul.mubr.f32.gmra.mrb[0].mxu0 %v1248
      %v2141 = vpop.f32.mrb[0].mxu0
      %v2142 = vadd.f32 0.0, %v2141
      %v2143 = vpop.f32.mrb[0].mxu0
      %2144 = vmatprep.mubr.f32.mxu0 0.0
      %2145 = vmatmul.mubr.f32.gmra.mrb[0].mxu0 %v1251
      %v2146 = vpop.f32.mrb[0].mxu0
      %v2147 = vadd.f32 0.0, %v2146
      %v2148 = vpop.f32.mrb[0].mxu0
      %2149 = vmatprep.mubr.f32.mxu0 0.0
      %2150 = vmatmul.mubr.f32.gmra.mrb[0].mxu0 %v1254
      %v2151 = vpop.f32.mrb[0].mxu0
      %v2152 = vadd.f32 0.0, %v2151
      %v2153 = vpop.f32.mrb[0].mxu0
      %2154 = vmatprep.mubr.f32.mxu0 0.0
      %2155 = vmatmul.mubr.f32.gmra.mrb[0].mxu0 %v1257
      %v2156 = vpop.f32.mrb[0].mxu0
      %v2157 = vadd.f32 0.0, %v2156
      %v2158 = vpop.f32.mrb[0].mxu0
      %2159 = vmatprep.mubr.f32.mxu0 0.0
      %2160 = vmatmul.mubr.f32.gmra.mrb[0].mxu0 %v1260
      %v2161 = vpop.f32.mrb[0].mxu0
      %v2162 = vadd.f32 0.0, %v2161
      %v2163 = vpop.f32.mrb[0].mxu0
      %2164 = vmatprep.mubr.f32.mxu0 0.0
      %2165 = vmatmul.mubr.f32.gmra.mrb[0].mxu0 %v1263
      %v2166 = vpop.f32.mrb[0].mxu0
      %v2167 = vadd.f32 0.0, %v2166
      %v2168 = vpop.f32.mrb[0].mxu0
      %2169 = vmatprep.mubr.f32.mxu0 0.0
      %2170 = vmatmul.mubr.f32.gmra.mrb[0].mxu0 %v1266
      %v2171 = vpop.f32.mrb[0].mxu0
      %v2172 = vadd.f32 0.0, %v2171
      %v2173 = vpop.f32.mrb[0].mxu0
      %2174 = vmatprep.mubr.f32.mxu0 0.0
      %2175 = vmatmul.mubr.f32.gmra.mrb[0].mxu0 %v1269
      %v2176 = vpop.f32.mrb[0].mxu0
      %v2177 = vadd.f32 0.0, %v2176
      %v2178 = vpop.f32.mrb[0].mxu0
      %2179 = vmatprep.mubr.f32.mxu0 0.0
      %2180 = vmatmul.mubr.f32.gmra.mrb[0].mxu0 %v1272
      %v2181 = vpop.f32.mrb[0].mxu0
      %v2182 = vadd.f32 0.0, %v2181
      %v2183 = vpop.f32.mrb[0].mxu0
      %2184 = vmatprep.mubr.f32.mxu0 0.0
      %2185 = vmatmul.mubr.f32.gmra.mrb[0].mxu0 %v1275
      %v2186 = vpop.f32.mrb[0].mxu0
      %v2187 = vadd.f32 0.0, %v2186
      %v2188 = vpop.f32.mrb[0].mxu0
      %2189 = vmatprep.mubr.f32.mxu0 0.0
      %2190 = vmatmul.mubr.f32.gmra.mrb[0].mxu0 %v1278
      %v2191 = vpop.f32.mrb[0].mxu0
      %v2192 = vadd.f32 0.0, %v2191
      %v2193 = vpop.f32.mrb[0].mxu0
      %2194 = vmatprep.mubr.f32.mxu0 0.0
      %2195 = vmatmul.mubr.f32.gmra.mrb[0].mxu0 %v1658
      %v2196 = vpop.f32.mrb[0].mxu0
      %v2197 = vadd.f32 0.0, %v2196
      %v2198 = vpop.f32.mrb[0].mxu0
      %2199 = vmatprep.mubr.f32.mxu0 0.0
      %2200 = vmatmul.mubr.f32.gmra.mrb[0].mxu0 %v1661
      %v2201 = vpop.f32.mrb[0].mxu0
      %v2202 = vadd.f32 0.0, %v2201
      %v2203 = vpop.f32.mrb[0].mxu0
      %2204 = vmatprep.mubr.f32.mxu0 0.0
      %2205 = vmatmul.mubr.f32.gmra.mrb[0].mxu0 %v2062
      %v2206 = vpop.f32.mrb[0].mxu0
      %v2207 = vadd.f32 0.0, %v2206
      %v2208 = vpop.f32.mrb[0].mxu0
      %2209 = vmatprep.mubr.f32.mxu0 0.0
      %2210 = vmatmul.mubr.f32.gmra.mrb[0].mxu0 %v2065
      %v2211 = vpop.f32.mrb[0].mxu0
      %v2212 = vadd.f32 0.0, %v2211
      %v2213 = vpop.f32.mrb[0].mxu0
      %2214 = vdwg.mxu0
      %v2216 = vsel %vm1231, %v1227, 0
      %v2219 = vsel %vm1231, %v1228, 0
      %2221 = vmatprep.subr.mxu0 0.0
      %2222 = vmatpush1.msra.mxu0 %v2059
      %2223 = vmatprep.subr.mxu0 0.0
      %2224 = vmatpush1.msra.mxu0 %v2068
      %2225 = vmatprep.subr.mxu0 0.0
      %2226 = vmatpush1.msra.mxu0 0.0
      %2227 = vmatprep.subr.mxu0 0.0
      %2228 = vmatpush1.msra.mxu0 0.0
      %2229 = vmatprep.subr.mxu0 0.0
      %2230 = vmatpush1.msra.mxu0 0.0
      %2231 = vmatprep.subr.mxu0 0.0
      %2232 = vmatpush1.msra.mxu0 0.0
      %2233 = vmatprep.subr.mxu0 0.0
      %2234 = vmatpush1.msra.mxu0 0.0
      %2235 = vmatprep.subr.mxu0 0.0
      %2236 = vmatpush1.msra.mxu0 0.0
      %2237 = vmatprep.subr.mxu0 0.0
      %2238 = vmatpush1.msra.mxu0 0.0
      %2239 = vmatprep.subr.mxu0 0.0
      %2240 = vmatpush1.msra.mxu0 0.0
      %2241 = vmatprep.subr.mxu0 0.0
      %2242 = vmatpush1.msra.mxu0 0.0
      %2243 = vmatprep.subr.mxu0 0.0
      %2244 = vmatpush1.msra.mxu0 0.0
      %2245 = vmatprep.subr.mxu0 0.0
      %2246 = vmatpush1.msra.mxu0 0.0
      %2247 = vmatprep.subr.mxu0 0.0
      %2248 = vmatpush1.msra.mxu0 0.0
      %2249 = vmatprep.subr.mxu0 0.0
      %2250 = vmatpush1.msra.mxu0 0.0
      %2251 = vmatprep.subr.mxu0 0.0
      %2252 = vmatpush1.msra.mxu0 0.0
      %2253 = vmatprep.subr.mxu0 0.0
      %2254 = vmatpush1.msra.mxu0 0.0
      %2255 = vmatprep.subr.mxu0 0.0
      %2256 = vmatpush1.msra.mxu0 0.0
      %2257 = vmatprep.subr.mxu0 0.0
      %2258 = vmatpush1.msra.mxu0 0.0
      %2259 = vmatprep.subr.mxu0 0.0
      %2260 = vmatpush1.msra.mxu0 0.0
      %2261 = vmatprep.subr.mxu0 0.0
      %2262 = vmatpush1.msra.mxu0 0.0
      %2263 = vmatprep.subr.mxu0 0.0
      %2264 = vmatpush1.msra.mxu0 0.0
      %2265 = vmatprep.subr.mxu0 0.0
      %2266 = vmatpush1.msra.mxu0 0.0
      %2267 = vmatprep.subr.mxu0 0.0
      %2268 = vmatpush1.msra.mxu0 0.0
      %2269 = vmatprep.subr.mxu0 0.0
      %2270 = vmatpush1.msra.mxu0 0.0
      %2271 = vmatprep.subr.mxu0 0.0
      %2272 = vmatpush1.msra.mxu0 0.0
      %2273 = vmatprep.subr.mxu0 0.0
      %2274 = vmatpush1.msra.mxu0 0.0
      %2275 = vmatprep.subr.mxu0 0.0
      %2276 = vmatpush1.msra.mxu0 0.0
      %2277 = vmatprep.subr.mxu0 0.0
      %2278 = vmatpush1.msra.mxu0 0.0
      %2279 = vmatprep.subr.mxu0 0.0
      %2280 = vmatpush1.msra.mxu0 0.0
      %2281 = vmatprep.subr.mxu0 0.0
      %2282 = vmatpush1.msra.mxu0 0.0
      %2283 = vmatprep.subr.mxu0 0.0
      %2284 = vmatpush1.msra.mxu0 0.0
      %2285 = vmatprep.mubr.f32.mxu0 0.0
      %2286 = vmatmul.mubr.f32.gmra.mrb[0].mxu0 %v1442
      %v2287 = vpop.f32.mrb[0].mxu0
      %v2288 = vadd.f32 0.0, %v2287
      %v2289 = vpop.f32.mrb[0].mxu0
      %2290 = vmatprep.mubr.f32.mxu0 0.0
      %2291 = vmatmul.mubr.f32.gmra.mrb[0].mxu0 %v1445
      %v2292 = vpop.f32.mrb[0].mxu0
      %v2293 = vadd.f32 0.0, %v2292
      %v2294 = vpop.f32.mrb[0].mxu0
      %2295 = vmatprep.mubr.f32.mxu0 0.0
      %2296 = vmatmul.mubr.f32.gmra.mrb[0].mxu0 %v1448
      %v2297 = vpop.f32.mrb[0].mxu0
      %v2298 = vadd.f32 0.0, %v2297
      %v2299 = vpop.f32.mrb[0].mxu0
      %2300 = vmatprep.mubr.f32.mxu0 0.0
      %2301 = vmatmul.mubr.f32.gmra.mrb[0].mxu0 %v1451
      %v2302 = vpop.f32.mrb[0].mxu0
      %v2303 = vadd.f32 0.0, %v2302
      %v2304 = vpop.f32.mrb[0].mxu0
      %2305 = vmatprep.mubr.f32.mxu0 0.0
      %2306 = vmatmul.mubr.f32.gmra.mrb[0].mxu0 %v1454
      %v2307 = vpop.f32.mrb[0].mxu0
      %v2308 = vadd.f32 0.0, %v2307
      %v2309 = vpop.f32.mrb[0].mxu0
      %2310 = vmatprep.mubr.f32.mxu0 0.0
      %2311 = vmatmul.mubr.f32.gmra.mrb[0].mxu0 %v1457
      %v2312 = vpop.f32.mrb[0].mxu0
      %v2313 = vadd.f32 0.0, %v2312
      %v2314 = vpop.f32.mrb[0].mxu0
      %2315 = vmatprep.mubr.f32.mxu0 0.0
      %2316 = vmatmul.mubr.f32.gmra.mrb[0].mxu0 %v1460
      %v2317 = vpop.f32.mrb[0].mxu0
      %v2318 = vadd.f32 0.0, %v2317
      %v2319 = vpop.f32.mrb[0].mxu0
      %2320 = vmatprep.mubr.f32.mxu0 0.0
      %2321 = vmatmul.mubr.f32.gmra.mrb[0].mxu0 %v1463
      %v2322 = vpop.f32.mrb[0].mxu0
      %v2323 = vadd.f32 0.0, %v2322
      %v2324 = vpop.f32.mrb[0].mxu0
      %2325 = vmatprep.mubr.f32.mxu0 0.0
      %2326 = vmatmul.mubr.f32.gmra.mrb[0].mxu0 %v1466
      %v2327 = vpop.f32.mrb[0].mxu0
      %v2328 = vadd.f32 0.0, %v2327
      %v2329 = vpop.f32.mrb[0].mxu0
      %2330 = vmatprep.mubr.f32.mxu0 0.0
      %2331 = vmatmul.mubr.f32.gmra.mrb[0].mxu0 %v1469
      %v2332 = vpop.f32.mrb[0].mxu0
      %v2333 = vadd.f32 0.0, %v2332
      %v2334 = vpop.f32.mrb[0].mxu0
      %2335 = vmatprep.mubr.f32.mxu0 0.0
      %2336 = vmatmul.mubr.f32.gmra.mrb[0].mxu0 %v1472
      %v2337 = vpop.f32.mrb[0].mxu0
      %v2338 = vadd.f32 0.0, %v2337
      %v2339 = vpop.f32.mrb[0].mxu0
      %2340 = vmatprep.mubr.f32.mxu0 0.0
      %2341 = vmatmul.mubr.f32.gmra.mrb[0].mxu0 %v1475
      %v2342 = vpop.f32.mrb[0].mxu0
      %v2343 = vadd.f32 0.0, %v2342
      %v2344 = vpop.f32.mrb[0].mxu0
      %2345 = vmatprep.mubr.f32.mxu0 0.0
      %2346 = vmatmul.mubr.f32.gmra.mrb[0].mxu0 %v1812
      %v2347 = vpop.f32.mrb[0].mxu0
      %v2348 = vadd.f32 0.0, %v2347
      %v2349 = vpop.f32.mrb[0].mxu0
      %2350 = vmatprep.mubr.f32.mxu0 0.0
      %2351 = vmatmul.mubr.f32.gmra.mrb[0].mxu0 %v1815
      %v2352 = vpop.f32.mrb[0].mxu0
      %v2353 = vadd.f32 0.0, %v2352
      %v2354 = vpop.f32.mrb[0].mxu0
      %2355 = vmatprep.mubr.f32.mxu0 0.0
      %2356 = vmatmul.mubr.f32.gmra.mrb[0].mxu0 %v2216
      %v2357 = vpop.f32.mrb[0].mxu0
      %v2358 = vadd.f32 0.0, %v2357
      %v2359 = vpop.f32.mrb[0].mxu0
      %2360 = vmatprep.mubr.f32.mxu0 0.0
      %2361 = vmatmul.mubr.f32.gmra.mrb[0].mxu0 %v2219
      %v2362 = vpop.f32.mrb[0].mxu0
      %v2363 = vadd.f32 0.0, %v2362
      %v2364 = vpop.f32.mrb[0].mxu0
      %2365 = vdwg.mxu0
      %v2366 = vld [vmem:[#allocation2] sm:$0xff]
      %v2367 = vld [vmem:[#allocation2 + $0x8] sm:$0xff]
      %v2368 = vld [vmem:[#allocation2 + $0x10] sm:$0xff]
      %v2369 = vld [vmem:[#allocation2 + $0x18] sm:$0xff]
      %v2370 = vld [vmem:[#allocation2 + $0x20] sm:$0xff]
      %v2371 = vld [vmem:[#allocation2 + $0x28] sm:$0xff]
      %v2372 = vld [vmem:[#allocation2 + $0x30] sm:$0xff]
      %v2373 = vld [vmem:[#allocation2 + $0x38] sm:$0xff]
      %v2374 = vld [vmem:[#allocation2 + $0x40] sm:$0xff]
      %v2375 = vld [vmem:[#allocation2 + $0x48] sm:$0xff]
      %v2376 = vld [vmem:[#allocation2 + $0x50] sm:$0xff]
      %v2377 = vld [vmem:[#allocation2 + $0x58] sm:$0xff]
      %v2378 = vld [vmem:[#allocation2 + $0x60] sm:$0xff]
      %v2379 = vld [vmem:[#allocation2 + $0x68] sm:$0xff]
      %v2380 = vld [vmem:[#allocation2 + $0x70] sm:$0xff]
      %v2381 = vld [vmem:[#allocation2 + $0x78] sm:$0xff]
      %v2382 = vadd.f32 %v2366, %v2137
      %v2383 = vadd.f32 %v2367, %v2142
      %v2384 = vadd.f32 %v2368, %v2147
      %v2385 = vadd.f32 %v2369, %v2152
      %v2386 = vadd.f32 %v2370, %v2157
      %v2387 = vadd.f32 %v2371, %v2162
      %v2388 = vadd.f32 %v2372, %v2167
      %v2389 = vadd.f32 %v2373, %v2172
      %v2390 = vadd.f32 %v2374, %v2177
      %v2391 = vadd.f32 %v2375, %v2182
      %v2392 = vadd.f32 %v2376, %v2187
      %v2393 = vadd.f32 %v2377, %v2192
      %v2394 = vadd.f32 %v2378, %v2197
      %v2395 = vadd.f32 %v2379, %v2202
      %v2396 = vadd.f32 %v2380, %v2207
      %v2397 = vadd.f32 %v2381, %v2212
      %2398 = vst.msk [vmem:[#allocation2] sm:$0xff] %vm1038, %v2382
      %2399 = vst.msk [vmem:[#allocation2 + $0x8] sm:$0xff] %vm1038, %v2383
      %2400 = vst.msk [vmem:[#allocation2 + $0x10] sm:$0xff] %vm1038, %v2384
      %2401 = vst.msk [vmem:[#allocation2 + $0x18] sm:$0xff] %vm1038, %v2385
      %2402 = vst.msk [vmem:[#allocation2 + $0x20] sm:$0xff] %vm1038, %v2386
      %2403 = vst.msk [vmem:[#allocation2 + $0x28] sm:$0xff] %vm1038, %v2387
      %2404 = vst.msk [vmem:[#allocation2 + $0x30] sm:$0xff] %vm1038, %v2388
      %2405 = vst.msk [vmem:[#allocation2 + $0x38] sm:$0xff] %vm1038, %v2389
      %2406 = vst.msk [vmem:[#allocation2 + $0x40] sm:$0xff] %vm1038, %v2390
      %2407 = vst.msk [vmem:[#allocation2 + $0x48] sm:$0xff] %vm1038, %v2391
      %2408 = vst.msk [vmem:[#allocation2 + $0x50] sm:$0xff] %vm1038, %v2392
      %2409 = vst.msk [vmem:[#allocation2 + $0x58] sm:$0xff] %vm1038, %v2393
      %2410 = vst.msk [vmem:[#allocation2 + $0x60] sm:$0xff] %vm1038, %v2394
      %2411 = vst.msk [vmem:[#allocation2 + $0x68] sm:$0xff] %vm1038, %v2395
      %2412 = vst.msk [vmem:[#allocation2 + $0x70] sm:$0xff] %vm1038, %v2396
      %2413 = vst.msk [vmem:[#allocation2 + $0x78] sm:$0xff] %vm1038, %v2397
      %v2414 = vld [vmem:[#allocation3] sm:$0xff]
      %v2415 = vld [vmem:[#allocation3 + $0x8] sm:$0xff]
      %v2416 = vld [vmem:[#allocation3 + $0x10] sm:$0xff]
      %v2417 = vld [vmem:[#allocation3 + $0x18] sm:$0xff]
      %v2418 = vld [vmem:[#allocation3 + $0x20] sm:$0xff]
      %v2419 = vld [vmem:[#allocation3 + $0x28] sm:$0xff]
      %v2420 = vld [vmem:[#allocation3 + $0x30] sm:$0xff]
      %v2421 = vld [vmem:[#allocation3 + $0x38] sm:$0xff]
      %v2422 = vld [vmem:[#allocation3 + $0x40] sm:$0xff]
      %v2423 = vld [vmem:[#allocation3 + $0x48] sm:$0xff]
      %v2424 = vld [vmem:[#allocation3 + $0x50] sm:$0xff]
      %v2425 = vld [vmem:[#allocation3 + $0x58] sm:$0xff]
      %v2426 = vld [vmem:[#allocation3 + $0x60] sm:$0xff]
      %v2427 = vld [vmem:[#allocation3 + $0x68] sm:$0xff]
      %v2428 = vld [vmem:[#allocation3 + $0x70] sm:$0xff]
      %v2429 = vld [vmem:[#allocation3 + $0x78] sm:$0xff]
      %v2430 = vadd.f32 %v2414, %v2288
      %v2431 = vadd.f32 %v2415, %v2293
      %v2432 = vadd.f32 %v2416, %v2298
      %v2433 = vadd.f32 %v2417, %v2303
      %v2434 = vadd.f32 %v2418, %v2308
      %v2435 = vadd.f32 %v2419, %v2313
      %v2436 = vadd.f32 %v2420, %v2318
      %v2437 = vadd.f32 %v2421, %v2323
      %v2438 = vadd.f32 %v2422, %v2328
      %v2439 = vadd.f32 %v2423, %v2333
      %v2440 = vadd.f32 %v2424, %v2338
      %v2441 = vadd.f32 %v2425, %v2343
      %v2442 = vadd.f32 %v2426, %v2348
      %v2443 = vadd.f32 %v2427, %v2353
      %v2444 = vadd.f32 %v2428, %v2358
      %v2445 = vadd.f32 %v2429, %v2363
      %2446 = vst.msk [vmem:[#allocation3] sm:$0xff] %vm1038, %v2430
      %2447 = vst.msk [vmem:[#allocation3 + $0x8] sm:$0xff] %vm1038, %v2431
      %2448 = vst.msk [vmem:[#allocation3 + $0x10] sm:$0xff] %vm1038, %v2432
      %2449 = vst.msk [vmem:[#allocation3 + $0x18] sm:$0xff] %vm1038, %v2433
      %2450 = vst.msk [vmem:[#allocation3 + $0x20] sm:$0xff] %vm1038, %v2434
      %2451 = vst.msk [vmem:[#allocation3 + $0x28] sm:$0xff] %vm1038, %v2435
      %2452 = vst.msk [vmem:[#allocation3 + $0x30] sm:$0xff] %vm1038, %v2436
      %2453 = vst.msk [vmem:[#allocation3 + $0x38] sm:$0xff] %vm1038, %v2437
      %2454 = vst.msk [vmem:[#allocation3 + $0x40] sm:$0xff] %vm1038, %v2438
      %2455 = vst.msk [vmem:[#allocation3 + $0x48] sm:$0xff] %vm1038, %v2439
      %2456 = vst.msk [vmem:[#allocation3 + $0x50] sm:$0xff] %vm1038, %v2440
      %2457 = vst.msk [vmem:[#allocation3 + $0x58] sm:$0xff] %vm1038, %v2441
      %2458 = vst.msk [vmem:[#allocation3 + $0x60] sm:$0xff] %vm1038, %v2442
      %2459 = vst.msk [vmem:[#allocation3 + $0x68] sm:$0xff] %vm1038, %v2443
      %2460 = vst.msk [vmem:[#allocation3 + $0x70] sm:$0xff] %vm1038, %v2444
      %2461 = vst.msk [vmem:[#allocation3 + $0x78] sm:$0xff] %vm1038, %v2445
      %v2462 = vld [vmem:[%s2] sm:$0x1]
      %v2463 = vld [vmem:[#allocation4] sm:$0x1]
      %s2464 = vtos %v2463
      %v2465 = vld [vmem:[#allocation2] sm:$0xff]
      %v2466 = vld [vmem:[#allocation2 + $0x8] sm:$0xff]
      %v2467 = vld [vmem:[#allocation2 + $0x10] sm:$0xff]
      %v2468 = vld [vmem:[#allocation2 + $0x18] sm:$0xff]
      %v2469 = vld [vmem:[#allocation2 + $0x20] sm:$0xff]
      %v2470 = vld [vmem:[#allocation2 + $0x28] sm:$0xff]
      %v2471 = vld [vmem:[#allocation2 + $0x30] sm:$0xff]
      %v2472 = vld [vmem:[#allocation2 + $0x38] sm:$0xff]
      %v2473 = vld [vmem:[#allocation2 + $0x40] sm:$0xff]
      %v2474 = vld [vmem:[#allocation2 + $0x48] sm:$0xff]
      %v2475 = vld [vmem:[#allocation2 + $0x50] sm:$0xff]
      %v2476 = vld [vmem:[#allocation2 + $0x58] sm:$0xff]
      %v2477 = vld [vmem:[#allocation2 + $0x60] sm:$0xff]
      %v2478 = vld [vmem:[#allocation2 + $0x68] sm:$0xff]
      %v2479 = vld [vmem:[#allocation2 + $0x70] sm:$0xff]
      %v2480 = vld [vmem:[#allocation2 + $0x78] sm:$0xff]
      %v2482 = vlaneseq
      %v2483 = vshrl.u32 %v2482, 7
      %v2484 = vsub.s32 0, %v2483
      %v2485 = vrot.slane %v2462, %v2484
      %v2487 = vadd.f32 %v2465, %v2485
      %v2488 = vadd.f32 %v2466, %v2485
      %v2489 = vadd.f32 %v2467, %v2485
      %v2490 = vadd.f32 %v2468, %v2485
      %v2491 = vadd.f32 %v2469, %v2485
      %v2492 = vadd.f32 %v2470, %v2485
      %v2493 = vadd.f32 %v2471, %v2485
      %v2494 = vadd.f32 %v2472, %v2485
      %v2495 = vadd.f32 %v2473, %v2485
      %v2496 = vadd.f32 %v2474, %v2485
      %v2497 = vadd.f32 %v2475, %v2485
      %v2498 = vadd.f32 %v2476, %v2485
      %v2499 = vadd.f32 %v2477, %v2485
      %v2500 = vadd.f32 %v2478, %v2485
      %v2501 = vadd.f32 %v2479, %v2485
      %v2502 = vadd.f32 %v2480, %v2485
      %v2503 = vld [vmem:[#allocation3] sm:$0xff]
      %v2504 = vld [vmem:[#allocation3 + $0x8] sm:$0xff]
      %v2505 = vld [vmem:[#allocation3 + $0x10] sm:$0xff]
      %v2506 = vld [vmem:[#allocation3 + $0x18] sm:$0xff]
      %v2507 = vld [vmem:[#allocation3 + $0x20] sm:$0xff]
      %v2508 = vld [vmem:[#allocation3 + $0x28] sm:$0xff]
      %v2509 = vld [vmem:[#allocation3 + $0x30] sm:$0xff]
      %v2510 = vld [vmem:[#allocation3 + $0x38] sm:$0xff]
      %v2511 = vld [vmem:[#allocation3 + $0x40] sm:$0xff]
      %v2512 = vld [vmem:[#allocation3 + $0x48] sm:$0xff]
      %v2513 = vld [vmem:[#allocation3 + $0x50] sm:$0xff]
      %v2514 = vld [vmem:[#allocation3 + $0x58] sm:$0xff]
      %v2515 = vld [vmem:[#allocation3 + $0x60] sm:$0xff]
      %v2516 = vld [vmem:[#allocation3 + $0x68] sm:$0xff]
      %v2517 = vld [vmem:[#allocation3 + $0x70] sm:$0xff]
      %v2518 = vld [vmem:[#allocation3 + $0x78] sm:$0xff]
      %v2519 = vadd.f32 %v2503, %v2485
      %v2520 = vadd.f32 %v2504, %v2485
      %v2521 = vadd.f32 %v2505, %v2485
      %v2522 = vadd.f32 %v2506, %v2485
      %v2523 = vadd.f32 %v2507, %v2485
      %v2524 = vadd.f32 %v2508, %v2485
      %v2525 = vadd.f32 %v2509, %v2485
      %v2526 = vadd.f32 %v2510, %v2485
      %v2527 = vadd.f32 %v2511, %v2485
      %v2528 = vadd.f32 %v2512, %v2485
      %v2529 = vadd.f32 %v2513, %v2485
      %v2530 = vadd.f32 %v2514, %v2485
      %v2531 = vadd.f32 %v2515, %v2485
      %v2532 = vadd.f32 %v2516, %v2485
      %v2533 = vadd.f32 %v2517, %v2485
      %v2534 = vadd.f32 %v2518, %v2485
      %vm2535 = vcmp.ge.f32.partialorder %v2487, 0.0
      %vm2536 = vcmp.ge.f32.partialorder %v2488, 0.0
      %vm2537 = vcmp.ge.f32.partialorder %v2489, 0.0
      %vm2538 = vcmp.ge.f32.partialorder %v2490, 0.0
      %vm2539 = vcmp.ge.f32.partialorder %v2491, 0.0
      %vm2540 = vcmp.ge.f32.partialorder %v2492, 0.0
      %vm2541 = vcmp.ge.f32.partialorder %v2493, 0.0
      %vm2542 = vcmp.ge.f32.partialorder %v2494, 0.0
      %vm2543 = vcmp.ge.f32.partialorder %v2495, 0.0
      %vm2544 = vcmp.ge.f32.partialorder %v2496, 0.0
      %vm2545 = vcmp.ge.f32.partialorder %v2497, 0.0
      %vm2546 = vcmp.ge.f32.partialorder %v2498, 0.0
      %vm2547 = vcmp.ge.f32.partialorder %v2499, 0.0
      %vm2548 = vcmp.ge.f32.partialorder %v2500, 0.0
      %vm2549 = vcmp.ge.f32.partialorder %v2501, 0.0
      %vm2550 = vcmp.ge.f32.partialorder %v2502, 0.0
      %v2551 = vstv %s2464
      %v2552 = vmul.f32 %v2551, %v2487
      %v2553 = vmul.f32 %v2551, %v2488
      %v2554 = vmul.f32 %v2551, %v2489
      %v2555 = vmul.f32 %v2551, %v2490
      %v2556 = vmul.f32 %v2551, %v2491
      %v2557 = vmul.f32 %v2551, %v2492
      %v2558 = vmul.f32 %v2551, %v2493
      %v2559 = vmul.f32 %v2551, %v2494
      %v2560 = vmul.f32 %v2551, %v2495
      %v2561 = vmul.f32 %v2551, %v2496
      %v2562 = vmul.f32 %v2551, %v2497
      %v2563 = vmul.f32 %v2551, %v2498
      %v2564 = vmul.f32 %v2551, %v2499
      %v2565 = vmul.f32 %v2551, %v2500
      %v2566 = vmul.f32 %v2551, %v2501
      %v2567 = vmul.f32 %v2551, %v2502
      %v2568 = vsel %vm2535, %v2487, %v2552
      %v2569 = vsel %vm2536, %v2488, %v2553
      %v2570 = vsel %vm2537, %v2489, %v2554
      %v2571 = vsel %vm2538, %v2490, %v2555
      %v2572 = vsel %vm2539, %v2491, %v2556
      %v2573 = vsel %vm2540, %v2492, %v2557
      %v2574 = vsel %vm2541, %v2493, %v2558
      %v2575 = vsel %vm2542, %v2494, %v2559
      %v2576 = vsel %vm2543, %v2495, %v2560
      %v2577 = vsel %vm2544, %v2496, %v2561
      %v2578 = vsel %vm2545, %v2497, %v2562
      %v2579 = vsel %vm2546, %v2498, %v2563
      %v2580 = vsel %vm2547, %v2499, %v2564
      %v2581 = vsel %vm2548, %v2500, %v2565
      %v2582 = vsel %vm2549, %v2501, %v2566
      %v2583 = vsel %vm2550, %v2502, %v2567
      %vm2584 = vcmp.ge.f32.partialorder %v2519, 0.0
      %vm2585 = vcmp.ge.f32.partialorder %v2520, 0.0
      %vm2586 = vcmp.ge.f32.partialorder %v2521, 0.0
      %vm2587 = vcmp.ge.f32.partialorder %v2522, 0.0
      %vm2588 = vcmp.ge.f32.partialorder %v2523, 0.0
      %vm2589 = vcmp.ge.f32.partialorder %v2524, 0.0
      %vm2590 = vcmp.ge.f32.partialorder %v2525, 0.0
      %vm2591 = vcmp.ge.f32.partialorder %v2526, 0.0
      %vm2592 = vcmp.ge.f32.partialorder %v2527, 0.0
      %vm2593 = vcmp.ge.f32.partialorder %v2528, 0.0
      %vm2594 = vcmp.ge.f32.partialorder %v2529, 0.0
      %vm2595 = vcmp.ge.f32.partialorder %v2530, 0.0
      %vm2596 = vcmp.ge.f32.partialorder %v2531, 0.0
      %vm2597 = vcmp.ge.f32.partialorder %v2532, 0.0
      %vm2598 = vcmp.ge.f32.partialorder %v2533, 0.0
      %vm2599 = vcmp.ge.f32.partialorder %v2534, 0.0
      %v2600 = vmul.f32 %v2551, %v2519
      %v2601 = vmul.f32 %v2551, %v2520
      %v2602 = vmul.f32 %v2551, %v2521
      %v2603 = vmul.f32 %v2551, %v2522
      %v2604 = vmul.f32 %v2551, %v2523
      %v2605 = vmul.f32 %v2551, %v2524
      %v2606 = vmul.f32 %v2551, %v2525
      %v2607 = vmul.f32 %v2551, %v2526
      %v2608 = vmul.f32 %v2551, %v2527
      %v2609 = vmul.f32 %v2551, %v2528
      %v2610 = vmul.f32 %v2551, %v2529
      %v2611 = vmul.f32 %v2551, %v2530
      %v2612 = vmul.f32 %v2551, %v2531
      %v2613 = vmul.f32 %v2551, %v2532
      %v2614 = vmul.f32 %v2551, %v2533
      %v2615 = vmul.f32 %v2551, %v2534
      %v2616 = vsel %vm2584, %v2519, %v2600
      %v2617 = vsel %vm2585, %v2520, %v2601
      %v2618 = vsel %vm2586, %v2521, %v2602
      %v2619 = vsel %vm2587, %v2522, %v2603
      %v2620 = vsel %vm2588, %v2523, %v2604
      %v2621 = vsel %vm2589, %v2524, %v2605
      %v2622 = vsel %vm2590, %v2525, %v2606
      %v2623 = vsel %vm2591, %v2526, %v2607
      %v2624 = vsel %vm2592, %v2527, %v2608
      %v2625 = vsel %vm2593, %v2528, %v2609
      %v2626 = vsel %vm2594, %v2529, %v2610
      %v2627 = vsel %vm2595, %v2530, %v2611
      %v2628 = vsel %vm2596, %v2531, %v2612
      %v2629 = vsel %vm2597, %v2532, %v2613
      %v2630 = vsel %vm2598, %v2533, %v2614
      %v2631 = vsel %vm2599, %v2534, %v2615
      %2632 = vst.msk [vmem:[%s237] sm:$0xff] %vm1038, %v2568
      %2633 = vst.msk [vmem:[%s237 + $0x8] sm:$0xff] %vm1038, %v2569
      %2634 = vst.msk [vmem:[%s237 + $0x10] sm:$0xff] %vm1038, %v2570
      %2635 = vst.msk [vmem:[%s237 + $0x18] sm:$0xff] %vm1038, %v2571
      %2636 = vst.msk [vmem:[%s237 + $0x20] sm:$0xff] %vm1038, %v2572
      %2637 = vst.msk [vmem:[%s237 + $0x28] sm:$0xff] %vm1038, %v2573
      %2638 = vst.msk [vmem:[%s237 + $0x30] sm:$0xff] %vm1038, %v2574
      %2639 = vst.msk [vmem:[%s237 + $0x38] sm:$0xff] %vm1038, %v2575
      %2640 = vst.msk [vmem:[%s237 + $0x40] sm:$0xff] %vm1038, %v2576
      %2641 = vst.msk [vmem:[%s237 + $0x48] sm:$0xff] %vm1038, %v2577
      %2642 = vst.msk [vmem:[%s237 + $0x50] sm:$0xff] %vm1038, %v2578
      %2643 = vst.msk [vmem:[%s237 + $0x58] sm:$0xff] %vm1038, %v2579
      %2644 = vst.msk [vmem:[%s237 + $0x60] sm:$0xff] %vm1038, %v2580
      %2645 = vst.msk [vmem:[%s237 + $0x68] sm:$0xff] %vm1038, %v2581
      %2646 = vst.msk [vmem:[%s237 + $0x70] sm:$0xff] %vm1038, %v2582
      %2647 = vst.msk [vmem:[%s237 + $0x78] sm:$0xff] %vm1038, %v2583
      %2664 = vrot.lane.b32.xlu0 %v2616, 8
      %v2665 = vpop.permute.xlu0 %2664
      %2666 = vrot.lane.b32.xlu0 %v2617, 8
      %v2667 = vpop.permute.xlu0 %2666
      %2668 = vrot.lane.b32.xlu0 %v2618, 8
      %v2669 = vpop.permute.xlu0 %2668
      %2670 = vrot.lane.b32.xlu0 %v2619, 8
      %v2671 = vpop.permute.xlu0 %2670
      %2672 = vrot.lane.b32.xlu0 %v2620, 8
      %v2673 = vpop.permute.xlu0 %2672
      %2674 = vrot.lane.b32.xlu0 %v2621, 8
      %v2675 = vpop.permute.xlu0 %2674
      %2676 = vrot.lane.b32.xlu0 %v2622, 8
      %v2677 = vpop.permute.xlu0 %2676
      %2678 = vrot.lane.b32.xlu0 %v2623, 8
      %v2679 = vpop.permute.xlu0 %2678
      %2680 = vrot.lane.b32.xlu0 %v2624, 8
      %v2681 = vpop.permute.xlu0 %2680
      %2682 = vrot.lane.b32.xlu0 %v2625, 8
      %v2683 = vpop.permute.xlu0 %2682
      %2684 = vrot.lane.b32.xlu0 %v2626, 8
      %v2685 = vpop.permute.xlu0 %2684
      %2686 = vrot.lane.b32.xlu0 %v2627, 8
      %v2687 = vpop.permute.xlu0 %2686
      %2688 = vrot.lane.b32.xlu0 %v2628, 8
      %v2689 = vpop.permute.xlu0 %2688
      %2690 = vrot.lane.b32.xlu0 %v2629, 8
      %v2691 = vpop.permute.xlu0 %2690
      %2692 = vrot.lane.b32.xlu0 %v2630, 8
      %v2693 = vpop.permute.xlu0 %2692
      %2694 = vrot.lane.b32.xlu0 %v2631, 8
      %v2695 = vpop.permute.xlu0 %2694
      %vm2712 = vcmask 130112
      %2713 = vst.msk [vmem:[%s237] sm:$0xff] %vm2712, %v2665
      %2714 = vst.msk [vmem:[%s237 + $0x8] sm:$0xff] %vm2712, %v2667
      %2715 = vst.msk [vmem:[%s237 + $0x10] sm:$0xff] %vm2712, %v2669
      %2716 = vst.msk [vmem:[%s237 + $0x18] sm:$0xff] %vm2712, %v2671
      %2717 = vst.msk [vmem:[%s237 + $0x20] sm:$0xff] %vm2712, %v2673
      %2718 = vst.msk [vmem:[%s237 + $0x28] sm:$0xff] %vm2712, %v2675
      %2719 = vst.msk [vmem:[%s237 + $0x30] sm:$0xff] %vm2712, %v2677
      %2720 = vst.msk [vmem:[%s237 + $0x38] sm:$0xff] %vm2712, %v2679
      %2721 = vst.msk [vmem:[%s237 + $0x40] sm:$0xff] %vm2712, %v2681
      %2722 = vst.msk [vmem:[%s237 + $0x48] sm:$0xff] %vm2712, %v2683
      %2723 = vst.msk [vmem:[%s237 + $0x50] sm:$0xff] %vm2712, %v2685
      %2724 = vst.msk [vmem:[%s237 + $0x58] sm:$0xff] %vm2712, %v2687
      %2725 = vst.msk [vmem:[%s237 + $0x60] sm:$0xff] %vm2712, %v2689
      %2726 = vst.msk [vmem:[%s237 + $0x68] sm:$0xff] %vm2712, %v2691
      %2727 = vst.msk [vmem:[%s237 + $0x70] sm:$0xff] %vm2712, %v2693
      %2728 = vst.msk [vmem:[%s237 + $0x78] sm:$0xff] %vm2712, %v2695
      %s2729 = smul.u32 8, %s22
      %p2730 = scmp.lt.s32.totalorder %s21, 1
      %s2731 = scalar_select %p2730, %s21, 1
      %p2732 = scmp.lt.s32.totalorder %s2729, 31
      %s2733 = scalar_select %p2732, %s2729, 31
      %s2734 = smul.addr %s2733, 2
      %s2735 = smul.addr %s2731, 64
      %s2736 = sadd.s32 %s2734, %s2735
      %s2737 = smul.addr %s2736, 8
      %s2738 = scalar_lea.vmem %s4, %s2737
      // Predicated region
      $region37: #{tpu_custom_call.1} parent=35 // pred_check
        %p2739 = pneg %p142
      $region38: #{tpu_custom_call.1} parent=35 // pred_check_branch
        %2741 = sbr.rel (%p2739) target = $region40
      $region39: #{tpu_custom_call.1} parent=35 // pred_region
        %s2742 = smul.u32 8, %s22
      $region40: #{tpu_custom_call.1} parent=35 // pred_fallthru
        _
    $region36: #{tpu_custom_call.1} parent=5 // pred_fallthru
      _
    %p2743 = scmp.le.s32.totalorder 2, %s12
    // Predicated region
    $region41: #{tpu_custom_call.1} parent=5 // pred_check
      %p2744 = pneg %p2743
    $region42: #{tpu_custom_call.1} parent=5 // pred_check_branch
      %2746 = sbr.rel (%p2744) target = $region44
    $region43: #{tpu_custom_call.1} parent=5 // pred_region
      %s2747 = ssub.s32 %s12, 2
      // Predicated region
      $region45: #{tpu_custom_call.1} parent=43 // pred_check
        %p2748 = pneg %p148
      $region46: #{tpu_custom_call.1} parent=43 // pred_check_branch
        %2750 = sbr.rel (%p2748) target = $region48
      $region47: #{tpu_custom_call.1} parent=43 // pred_region
        %s2751 = smul.u32 8, %s24
        %p2752 = scmp.lt.s32.totalorder %s23, 1
        %s2753 = scalar_select %p2752, %s23, 1
        %p2754 = scmp.lt.s32.totalorder %s2751, 31
        %s2755 = scalar_select %p2754, %s2751, 31
        %s2756 = smul.addr %s2755, 2
        %s2757 = smul.addr %s2753, 64
        %s2758 = sadd.s32 %s2756, %s2757
        %s2759 = smul.addr %s2758, 8
        %s2760 = scalar_lea.vmem %s4, %s2759
      $region48: #{tpu_custom_call.1} parent=43 // pred_fallthru
        _
    $region44: #{tpu_custom_call.1} parent=5 // pred_fallthru
      _
  $region6: #{tpu_custom_call.1} parent=0 // loop_footer
    %s16 = sadd.s32 1, %s12
  $region7: #{tpu_custom_call.1} parent=0 // loop_footer_branch
    %11 = sbr.rel target = $region3
  $region8: #{tpu_custom_call.1} parent=0 // loop_exit
    _

</llo_original>
